<compile_context>
chip_gen: v7x
topology: tpu7x:2x2x1
jax: 0.10.0
libtpu: 0.0.40
codegen_flags: <defaults>
</compile_context>

<pallas_src>
import jax
import jax.numpy as jnp
from jax import lax
from jax.experimental import pallas as pl
from jax.experimental.pallas import tpu as pltpu


def _round_up(x, m):
    return (x + m - 1) // m * m


def _softplus(x):
    # Numerically stable softplus = log1p(exp(x)).
    return jnp.maximum(x, 0.0) + jnp.log1p(jnp.exp(-jnp.abs(x)))


def bayesian_conv3d(x, weight_mu, weight_rho, eps, kernel_size):
    """x: [B, Cin, D, H, W]; weights/eps: [Cout, Cin, K, K, K].
    Returns NCDHW output matching F.conv3d(x, mu + softplus(rho)*eps, padding=K//2)."""
    B, Cin, D, H, W = x.shape
    Cout = weight_mu.shape[0]
    K = kernel_size
    p = K // 2
    K3 = K * K * K

    Dp, Hp, Wp = D + 2 * p, H + 2 * p, W + 2 * p
    Do, Ho, Wo = Dp - K + 1, Hp - K + 1, Wp - K + 1   # == D, H, W for odd K

    HWp = Hp * Wp
    M_plane = _round_up(HWp, 128)            # lane-dense output plane width
    hw_halo = (K - 1) * Wp + (K - 1)         # max in-plane tap offset
    Mx = _round_up(M_plane + hw_halo, 128)   # input plane width incl. halo
    Cin_p = _round_up(Cin, 8)                # sublane-aligned contraction dim

    # ---- one-time wrapper glue (plain JAX, O(input)+O(weight) bytes) ----------
    # Sample the Bayesian weight once; tap-major layout [K^3, Cout, Cin_p].
    w = weight_mu + _softplus(weight_rho) * eps                 # [Cout,Cin,K,K,K]
    w = jnp.transpose(w, (2, 3, 4, 0, 1)).reshape(K3, Cout, Cin)
    w = jnp.pad(w, ((0, 0), (0, 0), (0, Cin_p - Cin)))          # [K3,Cout,Cin_p]

    # Pad spatially, put Cin next to the flattened (Hp*Wp) lane axis, pad to
    # aligned extents.  No K^3 unfold -- this is ~input-sized, not 27x.
    x_pad = jnp.pad(x, ((0, 0), (0, 0), (p, p), (p, p), (p, p)))
    x_r = jnp.transpose(x_pad, (0, 2, 1, 3, 4)).reshape(B, Dp, Cin, HWp)
    x_r = jnp.pad(x_r, ((0, 0), (0, 0), (0, Cin_p - Cin), (0, Mx - HWp)))

    def kernel(*refs):
        x_refs = refs[:K]          # K depth-shifted views of the padded input
        w_ref = refs[K]            # [K^3, Cout, Cin_p], constant block
        o_ref = refs[K + 1]        # [1, 1, Cout, M_plane]
        acc = jnp.zeros((Cout, M_plane), jnp.float32)
        for kd in range(K):
            xp = x_refs[kd][0, 0]                      # (Cin_p, Mx) in VMEM
            for kh in range(K):
                for kw in range(K):
                    off = kh * Wp + kw                 # static lane offset
                    tap = (kd * K + kh) * K + kw
                    acc = acc + jnp.dot(
                        w_ref[tap], xp[:, off:off + M_plane],
                        preferred_element_type=jnp.float32)
        o_ref[0, 0] = acc.astype(o_ref.dtype)

    # K depth-shifted input specs on the SAME array (block index d + kd).
    in_specs = [
        pl.BlockSpec((1, 1, Cin_p, Mx), (lambda b, d, kd=kd: (b, d + kd, 0, 0)))
        for kd in range(K)
    ]
    # Pre-sampled weight: constant index -> DMA'd once, stays resident.
    in_specs.append(pl.BlockSpec((K3, Cout, Cin_p), lambda b, d: (0, 0, 0)))

    out = pl.pallas_call(
        kernel,
        out_shape=jax.ShapeDtypeStruct((B, Do, Cout, M_plane), jnp.float32),
        grid=(B, Do),
        in_specs=in_specs,
        out_specs=pl.BlockSpec((1, 1, Cout, M_plane), lambda b, d: (b, d, 0, 0)),
        compiler_params=pltpu.CompilerParams(
            dimension_semantics=("parallel", "parallel"),
            vmem_limit_bytes=32 << 20),
    )(*([x_r] * K), w)

    # [B, Do, Cout, M_plane] -> drop lane/halo padding -> NCDHW.
    out = out[..., :HWp].reshape(B, Do, Cout, Hp, Wp)[..., :Ho, :Wo]
    return jnp.transpose(out, (0, 2, 1, 3, 4))


if __name__ == "__main__":
    key = jax.random.PRNGKey(0)
    kx, kmu, keps = jax.random.split(key, 3)

    B, Cin, Cout, K = 2, 4, 8, 3
    D = H = W = 8

    x = jax.random.normal(kx, (B, Cin, D, H, W), dtype=jnp.float32)

    # Module __init__: mu=zeros, rho=-3.0.  Use a small random mu so both terms
    # of the sampled weight are exercised; eps is the explicit randn_like draw.
    weight_mu = 0.1 * jax.random.normal(kmu, (Cout, Cin, K, K, K), dtype=jnp.float32)
    weight_rho = jnp.full((Cout, Cin, K, K, K), -3.0, dtype=jnp.float32)
    eps = jax.random.normal(keps, (Cout, Cin, K, K, K), dtype=jnp.float32)

    out = bayesian_conv3d(x, weight_mu, weight_rho, eps, K)
    out = jax.block_until_ready(out)

    # Pure-JAX reference with the identical sampled weight (F.conv3d, padding=K//2).
    w_ref = weight_mu + _softplus(weight_rho) * eps
    ref = lax.conv_general_dilated(
        x, w_ref, window_strides=(1, 1, 1), padding=[(K // 2, K // 2)] * 3,
        dimension_numbers=("NCDHW", "OIDHW", "NCDHW"))

    assert out.shape == ref.shape == (B, Cout, D, H, W)
    assert jnp.allclose(out, ref, rtol=1e-3, atol=1e-3), float(jnp.max(jnp.abs(out - ref)))
    print("KERNEL_OK")
</pallas_src>

<mosaic_0001>
module attributes {stable_mosaic.version = 11 : i64} {
  func.func @kernel(%arg0: i32, %arg1: i32, %arg2: memref<1x1x8x256xf32, #tpu.memory_space<vmem>>, %arg3: memref<1x1x8x256xf32, #tpu.memory_space<vmem>>, %arg4: memref<1x1x8x256xf32, #tpu.memory_space<vmem>>, %arg5: memref<27x8x8xf32, #tpu.memory_space<vmem>>, %arg6: memref<1x1x8x128xf32, #tpu.memory_space<vmem>>) attributes {dimension_semantics = [#tpu.dimension_semantics<parallel>, #tpu.dimension_semantics<parallel>], iteration_bounds = array<i64: 2, 8>, scalar_prefetch = 0 : i64, scratch_operands = 0 : i64, tpu.core_type = #tpu.core_type<tc>, window_params = [{transform_indices = @transform_0, window_bounds = array<i64: 1, 1, 8, 256>}, {transform_indices = @transform_1, window_bounds = array<i64: 1, 1, 8, 256>}, {transform_indices = @transform_2, window_bounds = array<i64: 1, 1, 8, 256>}, {pipeline_mode = #tpu.pipeline_mode<synchronous>, transform_indices = @transform_3, window_bounds = array<i64: 27, 8, 8>}, {transform_indices = @transform_4, window_bounds = array<i64: 1, 1, 8, 128>}]} {
    %cst = arith.constant 0.000000e+00 : f32
    %0 = vector.broadcast %cst : f32 to vector<8x128xf32>
    %c0 = arith.constant 0 : index
    %c0_0 = arith.constant 0 : index
    %c0_1 = arith.constant 0 : index
    %c0_2 = arith.constant 0 : index
    %1 = vector.load %arg2[%c0, %c0_0, %c0_1, %c0_2] : memref<1x1x8x256xf32, #tpu.memory_space<vmem>>, vector<1x1x8x256xf32>
    %2 = vector.shape_cast %1 : vector<1x1x8x256xf32> to vector<8x256xf32>
    %c0_3 = arith.constant 0 : index
    %c0_4 = arith.constant 0 : index
    %c0_5 = arith.constant 0 : index
    %3 = vector.load %arg5[%c0_3, %c0_4, %c0_5] : memref<27x8x8xf32, #tpu.memory_space<vmem>>, vector<1x8x8xf32>
    %4 = vector.shape_cast %3 : vector<1x8x8xf32> to vector<8x8xf32>
    %5 = vector.extract_strided_slice %2 {offsets = [0, 0], sizes = [8, 128], strides = [1, 1]} : vector<8x256xf32> to vector<8x128xf32>
    %cst_6 = arith.constant dense<0.000000e+00> : vector<8x128xf32>
    %6 = tpu.matmul %4, %5, %cst_6 {dimension_numbers = #tpu.dot_dimension_numbers<[1], [0], [0], [1], [0, 0, 1, 1], [], []>} : vector<8x8xf32>, vector<8x128xf32>, vector<8x128xf32> -> vector<8x128xf32>
    %7 = arith.addf %0, %6 : vector<8x128xf32>
    %c1 = arith.constant 1 : index
    %c0_7 = arith.constant 0 : index
    %c0_8 = arith.constant 0 : index
    %8 = vector.load %arg5[%c1, %c0_7, %c0_8] : memref<27x8x8xf32, #tpu.memory_space<vmem>>, vector<1x8x8xf32>
    %9 = vector.shape_cast %8 : vector<1x8x8xf32> to vector<8x8xf32>
    %10 = vector.extract_strided_slice %2 {offsets = [0, 1], sizes = [8, 128], strides = [1, 1]} : vector<8x256xf32> to vector<8x128xf32>
    %cst_9 = arith.constant dense<0.000000e+00> : vector<8x128xf32>
    %11 = tpu.matmul %9, %10, %cst_9 {dimension_numbers = #tpu.dot_dimension_numbers<[1], [0], [0], [1], [0, 0, 1, 1], [], []>} : vector<8x8xf32>, vector<8x128xf32>, vector<8x128xf32> -> vector<8x128xf32>
    %12 = arith.addf %7, %11 : vector<8x128xf32>
    %c2 = arith.constant 2 : index
    %c0_10 = arith.constant 0 : index
    %c0_11 = arith.constant 0 : index
    %13 = vector.load %arg5[%c2, %c0_10, %c0_11] : memref<27x8x8xf32, #tpu.memory_space<vmem>>, vector<1x8x8xf32>
    %14 = vector.shape_cast %13 : vector<1x8x8xf32> to vector<8x8xf32>
    %15 = vector.extract_strided_slice %2 {offsets = [0, 2], sizes = [8, 128], strides = [1, 1]} : vector<8x256xf32> to vector<8x128xf32>
    %cst_12 = arith.constant dense<0.000000e+00> : vector<8x128xf32>
    %16 = tpu.matmul %14, %15, %cst_12 {dimension_numbers = #tpu.dot_dimension_numbers<[1], [0], [0], [1], [0, 0, 1, 1], [], []>} : vector<8x8xf32>, vector<8x128xf32>, vector<8x128xf32> -> vector<8x128xf32>
    %17 = arith.addf %12, %16 : vector<8x128xf32>
    %c3 = arith.constant 3 : index
    %c0_13 = arith.constant 0 : index
    %c0_14 = arith.constant 0 : index
    %18 = vector.load %arg5[%c3, %c0_13, %c0_14] : memref<27x8x8xf32, #tpu.memory_space<vmem>>, vector<1x8x8xf32>
    %19 = vector.shape_cast %18 : vector<1x8x8xf32> to vector<8x8xf32>
    %20 = vector.extract_strided_slice %2 {offsets = [0, 10], sizes = [8, 128], strides = [1, 1]} : vector<8x256xf32> to vector<8x128xf32>
    %cst_15 = arith.constant dense<0.000000e+00> : vector<8x128xf32>
    %21 = tpu.matmul %19, %20, %cst_15 {dimension_numbers = #tpu.dot_dimension_numbers<[1], [0], [0], [1], [0, 0, 1, 1], [], []>} : vector<8x8xf32>, vector<8x128xf32>, vector<8x128xf32> -> vector<8x128xf32>
    %22 = arith.addf %17, %21 : vector<8x128xf32>
    %c4 = arith.constant 4 : index
    %c0_16 = arith.constant 0 : index
    %c0_17 = arith.constant 0 : index
    %23 = vector.load %arg5[%c4, %c0_16, %c0_17] : memref<27x8x8xf32, #tpu.memory_space<vmem>>, vector<1x8x8xf32>
    %24 = vector.shape_cast %23 : vector<1x8x8xf32> to vector<8x8xf32>
    %25 = vector.extract_strided_slice %2 {offsets = [0, 11], sizes = [8, 128], strides = [1, 1]} : vector<8x256xf32> to vector<8x128xf32>
    %cst_18 = arith.constant dense<0.000000e+00> : vector<8x128xf32>
    %26 = tpu.matmul %24, %25, %cst_18 {dimension_numbers = #tpu.dot_dimension_numbers<[1], [0], [0], [1], [0, 0, 1, 1], [], []>} : vector<8x8xf32>, vector<8x128xf32>, vector<8x128xf32> -> vector<8x128xf32>
    %27 = arith.addf %22, %26 : vector<8x128xf32>
    %c5 = arith.constant 5 : index
    %c0_19 = arith.constant 0 : index
    %c0_20 = arith.constant 0 : index
    %28 = vector.load %arg5[%c5, %c0_19, %c0_20] : memref<27x8x8xf32, #tpu.memory_space<vmem>>, vector<1x8x8xf32>
    %29 = vector.shape_cast %28 : vector<1x8x8xf32> to vector<8x8xf32>
    %30 = vector.extract_strided_slice %2 {offsets = [0, 12], sizes = [8, 128], strides = [1, 1]} : vector<8x256xf32> to vector<8x128xf32>
    %cst_21 = arith.constant dense<0.000000e+00> : vector<8x128xf32>
    %31 = tpu.matmul %29, %30, %cst_21 {dimension_numbers = #tpu.dot_dimension_numbers<[1], [0], [0], [1], [0, 0, 1, 1], [], []>} : vector<8x8xf32>, vector<8x128xf32>, vector<8x128xf32> -> vector<8x128xf32>
    %32 = arith.addf %27, %31 : vector<8x128xf32>
    %c6 = arith.constant 6 : index
    %c0_22 = arith.constant 0 : index
    %c0_23 = arith.constant 0 : index
    %33 = vector.load %arg5[%c6, %c0_22, %c0_23] : memref<27x8x8xf32, #tpu.memory_space<vmem>>, vector<1x8x8xf32>
    %34 = vector.shape_cast %33 : vector<1x8x8xf32> to vector<8x8xf32>
    %35 = vector.extract_strided_slice %2 {offsets = [0, 20], sizes = [8, 128], strides = [1, 1]} : vector<8x256xf32> to vector<8x128xf32>
    %cst_24 = arith.constant dense<0.000000e+00> : vector<8x128xf32>
    %36 = tpu.matmul %34, %35, %cst_24 {dimension_numbers = #tpu.dot_dimension_numbers<[1], [0], [0], [1], [0, 0, 1, 1], [], []>} : vector<8x8xf32>, vector<8x128xf32>, vector<8x128xf32> -> vector<8x128xf32>
    %37 = arith.addf %32, %36 : vector<8x128xf32>
    %c7 = arith.constant 7 : index
    %c0_25 = arith.constant 0 : index
    %c0_26 = arith.constant 0 : index
    %38 = vector.load %arg5[%c7, %c0_25, %c0_26] : memref<27x8x8xf32, #tpu.memory_space<vmem>>, vector<1x8x8xf32>
    %39 = vector.shape_cast %38 : vector<1x8x8xf32> to vector<8x8xf32>
    %40 = vector.extract_strided_slice %2 {offsets = [0, 21], sizes = [8, 128], strides = [1, 1]} : vector<8x256xf32> to vector<8x128xf32>
    %cst_27 = arith.constant dense<0.000000e+00> : vector<8x128xf32>
    %41 = tpu.matmul %39, %40, %cst_27 {dimension_numbers = #tpu.dot_dimension_numbers<[1], [0], [0], [1], [0, 0, 1, 1], [], []>} : vector<8x8xf32>, vector<8x128xf32>, vector<8x128xf32> -> vector<8x128xf32>
    %42 = arith.addf %37, %41 : vector<8x128xf32>
    %c8 = arith.constant 8 : index
    %c0_28 = arith.constant 0 : index
    %c0_29 = arith.constant 0 : index
    %43 = vector.load %arg5[%c8, %c0_28, %c0_29] : memref<27x8x8xf32, #tpu.memory_space<vmem>>, vector<1x8x8xf32>
    %44 = vector.shape_cast %43 : vector<1x8x8xf32> to vector<8x8xf32>
    %45 = vector.extract_strided_slice %2 {offsets = [0, 22], sizes = [8, 128], strides = [1, 1]} : vector<8x256xf32> to vector<8x128xf32>
    %cst_30 = arith.constant dense<0.000000e+00> : vector<8x128xf32>
    %46 = tpu.matmul %44, %45, %cst_30 {dimension_numbers = #tpu.dot_dimension_numbers<[1], [0], [0], [1], [0, 0, 1, 1], [], []>} : vector<8x8xf32>, vector<8x128xf32>, vector<8x128xf32> -> vector<8x128xf32>
    %47 = arith.addf %42, %46 : vector<8x128xf32>
    %c0_31 = arith.constant 0 : index
    %c0_32 = arith.constant 0 : index
    %c0_33 = arith.constant 0 : index
    %c0_34 = arith.constant 0 : index
    %48 = vector.load %arg3[%c0_31, %c0_32, %c0_33, %c0_34] : memref<1x1x8x256xf32, #tpu.memory_space<vmem>>, vector<1x1x8x256xf32>
    %49 = vector.shape_cast %48 : vector<1x1x8x256xf32> to vector<8x256xf32>
    %c9 = arith.constant 9 : index
    %c0_35 = arith.constant 0 : index
    %c0_36 = arith.constant 0 : index
    %50 = vector.load %arg5[%c9, %c0_35, %c0_36] : memref<27x8x8xf32, #tpu.memory_space<vmem>>, vector<1x8x8xf32>
    %51 = vector.shape_cast %50 : vector<1x8x8xf32> to vector<8x8xf32>
    %52 = vector.extract_strided_slice %49 {offsets = [0, 0], sizes = [8, 128], strides = [1, 1]} : vector<8x256xf32> to vector<8x128xf32>
    %cst_37 = arith.constant dense<0.000000e+00> : vector<8x128xf32>
    %53 = tpu.matmul %51, %52, %cst_37 {dimension_numbers = #tpu.dot_dimension_numbers<[1], [0], [0], [1], [0, 0, 1, 1], [], []>} : vector<8x8xf32>, vector<8x128xf32>, vector<8x128xf32> -> vector<8x128xf32>
    %54 = arith.addf %47, %53 : vector<8x128xf32>
    %c10 = arith.constant 10 : index
    %c0_38 = arith.constant 0 : index
    %c0_39 = arith.constant 0 : index
    %55 = vector.load %arg5[%c10, %c0_38, %c0_39] : memref<27x8x8xf32, #tpu.memory_space<vmem>>, vector<1x8x8xf32>
    %56 = vector.shape_cast %55 : vector<1x8x8xf32> to vector<8x8xf32>
    %57 = vector.extract_strided_slice %49 {offsets = [0, 1], sizes = [8, 128], strides = [1, 1]} : vector<8x256xf32> to vector<8x128xf32>
    %cst_40 = arith.constant dense<0.000000e+00> : vector<8x128xf32>
    %58 = tpu.matmul %56, %57, %cst_40 {dimension_numbers = #tpu.dot_dimension_numbers<[1], [0], [0], [1], [0, 0, 1, 1], [], []>} : vector<8x8xf32>, vector<8x128xf32>, vector<8x128xf32> -> vector<8x128xf32>
    %59 = arith.addf %54, %58 : vector<8x128xf32>
    %c11 = arith.constant 11 : index
    %c0_41 = arith.constant 0 : index
    %c0_42 = arith.constant 0 : index
    %60 = vector.load %arg5[%c11, %c0_41, %c0_42] : memref<27x8x8xf32, #tpu.memory_space<vmem>>, vector<1x8x8xf32>
    %61 = vector.shape_cast %60 : vector<1x8x8xf32> to vector<8x8xf32>
    %62 = vector.extract_strided_slice %49 {offsets = [0, 2], sizes = [8, 128], strides = [1, 1]} : vector<8x256xf32> to vector<8x128xf32>
    %cst_43 = arith.constant dense<0.000000e+00> : vector<8x128xf32>
    %63 = tpu.matmul %61, %62, %cst_43 {dimension_numbers = #tpu.dot_dimension_numbers<[1], [0], [0], [1], [0, 0, 1, 1], [], []>} : vector<8x8xf32>, vector<8x128xf32>, vector<8x128xf32> -> vector<8x128xf32>
    %64 = arith.addf %59, %63 : vector<8x128xf32>
    %c12 = arith.constant 12 : index
    %c0_44 = arith.constant 0 : index
    %c0_45 = arith.constant 0 : index
    %65 = vector.load %arg5[%c12, %c0_44, %c0_45] : memref<27x8x8xf32, #tpu.memory_space<vmem>>, vector<1x8x8xf32>
    %66 = vector.shape_cast %65 : vector<1x8x8xf32> to vector<8x8xf32>
    %67 = vector.extract_strided_slice %49 {offsets = [0, 10], sizes = [8, 128], strides = [1, 1]} : vector<8x256xf32> to vector<8x128xf32>
    %cst_46 = arith.constant dense<0.000000e+00> : vector<8x128xf32>
    %68 = tpu.matmul %66, %67, %cst_46 {dimension_numbers = #tpu.dot_dimension_numbers<[1], [0], [0], [1], [0, 0, 1, 1], [], []>} : vector<8x8xf32>, vector<8x128xf32>, vector<8x128xf32> -> vector<8x128xf32>
    %69 = arith.addf %64, %68 : vector<8x128xf32>
    %c13 = arith.constant 13 : index
    %c0_47 = arith.constant 0 : index
    %c0_48 = arith.constant 0 : index
    %70 = vector.load %arg5[%c13, %c0_47, %c0_48] : memref<27x8x8xf32, #tpu.memory_space<vmem>>, vector<1x8x8xf32>
    %71 = vector.shape_cast %70 : vector<1x8x8xf32> to vector<8x8xf32>
    %72 = vector.extract_strided_slice %49 {offsets = [0, 11], sizes = [8, 128], strides = [1, 1]} : vector<8x256xf32> to vector<8x128xf32>
    %cst_49 = arith.constant dense<0.000000e+00> : vector<8x128xf32>
    %73 = tpu.matmul %71, %72, %cst_49 {dimension_numbers = #tpu.dot_dimension_numbers<[1], [0], [0], [1], [0, 0, 1, 1], [], []>} : vector<8x8xf32>, vector<8x128xf32>, vector<8x128xf32> -> vector<8x128xf32>
    %74 = arith.addf %69, %73 : vector<8x128xf32>
    %c14 = arith.constant 14 : index
    %c0_50 = arith.constant 0 : index
    %c0_51 = arith.constant 0 : index
    %75 = vector.load %arg5[%c14, %c0_50, %c0_51] : memref<27x8x8xf32, #tpu.memory_space<vmem>>, vector<1x8x8xf32>
    %76 = vector.shape_cast %75 : vector<1x8x8xf32> to vector<8x8xf32>
    %77 = vector.extract_strided_slice %49 {offsets = [0, 12], sizes = [8, 128], strides = [1, 1]} : vector<8x256xf32> to vector<8x128xf32>
    %cst_52 = arith.constant dense<0.000000e+00> : vector<8x128xf32>
    %78 = tpu.matmul %76, %77, %cst_52 {dimension_numbers = #tpu.dot_dimension_numbers<[1], [0], [0], [1], [0, 0, 1, 1], [], []>} : vector<8x8xf32>, vector<8x128xf32>, vector<8x128xf32> -> vector<8x128xf32>
    %79 = arith.addf %74, %78 : vector<8x128xf32>
    %c15 = arith.constant 15 : index
    %c0_53 = arith.constant 0 : index
    %c0_54 = arith.constant 0 : index
    %80 = vector.load %arg5[%c15, %c0_53, %c0_54] : memref<27x8x8xf32, #tpu.memory_space<vmem>>, vector<1x8x8xf32>
    %81 = vector.shape_cast %80 : vector<1x8x8xf32> to vector<8x8xf32>
    %82 = vector.extract_strided_slice %49 {offsets = [0, 20], sizes = [8, 128], strides = [1, 1]} : vector<8x256xf32> to vector<8x128xf32>
    %cst_55 = arith.constant dense<0.000000e+00> : vector<8x128xf32>
    %83 = tpu.matmul %81, %82, %cst_55 {dimension_numbers = #tpu.dot_dimension_numbers<[1], [0], [0], [1], [0, 0, 1, 1], [], []>} : vector<8x8xf32>, vector<8x128xf32>, vector<8x128xf32> -> vector<8x128xf32>
    %84 = arith.addf %79, %83 : vector<8x128xf32>
    %c16 = arith.constant 16 : index
    %c0_56 = arith.constant 0 : index
    %c0_57 = arith.constant 0 : index
    %85 = vector.load %arg5[%c16, %c0_56, %c0_57] : memref<27x8x8xf32, #tpu.memory_space<vmem>>, vector<1x8x8xf32>
    %86 = vector.shape_cast %85 : vector<1x8x8xf32> to vector<8x8xf32>
    %87 = vector.extract_strided_slice %49 {offsets = [0, 21], sizes = [8, 128], strides = [1, 1]} : vector<8x256xf32> to vector<8x128xf32>
    %cst_58 = arith.constant dense<0.000000e+00> : vector<8x128xf32>
    %88 = tpu.matmul %86, %87, %cst_58 {dimension_numbers = #tpu.dot_dimension_numbers<[1], [0], [0], [1], [0, 0, 1, 1], [], []>} : vector<8x8xf32>, vector<8x128xf32>, vector<8x128xf32> -> vector<8x128xf32>
    %89 = arith.addf %84, %88 : vector<8x128xf32>
    %c17 = arith.constant 17 : index
    %c0_59 = arith.constant 0 : index
    %c0_60 = arith.constant 0 : index
    %90 = vector.load %arg5[%c17, %c0_59, %c0_60] : memref<27x8x8xf32, #tpu.memory_space<vmem>>, vector<1x8x8xf32>
    %91 = vector.shape_cast %90 : vector<1x8x8xf32> to vector<8x8xf32>
    %92 = vector.extract_strided_slice %49 {offsets = [0, 22], sizes = [8, 128], strides = [1, 1]} : vector<8x256xf32> to vector<8x128xf32>
    %cst_61 = arith.constant dense<0.000000e+00> : vector<8x128xf32>
    %93 = tpu.matmul %91, %92, %cst_61 {dimension_numbers = #tpu.dot_dimension_numbers<[1], [0], [0], [1], [0, 0, 1, 1], [], []>} : vector<8x8xf32>, vector<8x128xf32>, vector<8x128xf32> -> vector<8x128xf32>
    %94 = arith.addf %89, %93 : vector<8x128xf32>
    %c0_62 = arith.constant 0 : index
    %c0_63 = arith.constant 0 : index
    %c0_64 = arith.constant 0 : index
    %c0_65 = arith.constant 0 : index
    %95 = vector.load %arg4[%c0_62, %c0_63, %c0_64, %c0_65] : memref<1x1x8x256xf32, #tpu.memory_space<vmem>>, vector<1x1x8x256xf32>
    %96 = vector.shape_cast %95 : vector<1x1x8x256xf32> to vector<8x256xf32>
    %c18 = arith.constant 18 : index
    %c0_66 = arith.constant 0 : index
    %c0_67 = arith.constant 0 : index
    %97 = vector.load %arg5[%c18, %c0_66, %c0_67] : memref<27x8x8xf32, #tpu.memory_space<vmem>>, vector<1x8x8xf32>
    %98 = vector.shape_cast %97 : vector<1x8x8xf32> to vector<8x8xf32>
    %99 = vector.extract_strided_slice %96 {offsets = [0, 0], sizes = [8, 128], strides = [1, 1]} : vector<8x256xf32> to vector<8x128xf32>
    %cst_68 = arith.constant dense<0.000000e+00> : vector<8x128xf32>
    %100 = tpu.matmul %98, %99, %cst_68 {dimension_numbers = #tpu.dot_dimension_numbers<[1], [0], [0], [1], [0, 0, 1, 1], [], []>} : vector<8x8xf32>, vector<8x128xf32>, vector<8x128xf32> -> vector<8x128xf32>
    %101 = arith.addf %94, %100 : vector<8x128xf32>
    %c19 = arith.constant 19 : index
    %c0_69 = arith.constant 0 : index
    %c0_70 = arith.constant 0 : index
    %102 = vector.load %arg5[%c19, %c0_69, %c0_70] : memref<27x8x8xf32, #tpu.memory_space<vmem>>, vector<1x8x8xf32>
    %103 = vector.shape_cast %102 : vector<1x8x8xf32> to vector<8x8xf32>
    %104 = vector.extract_strided_slice %96 {offsets = [0, 1], sizes = [8, 128], strides = [1, 1]} : vector<8x256xf32> to vector<8x128xf32>
    %cst_71 = arith.constant dense<0.000000e+00> : vector<8x128xf32>
    %105 = tpu.matmul %103, %104, %cst_71 {dimension_numbers = #tpu.dot_dimension_numbers<[1], [0], [0], [1], [0, 0, 1, 1], [], []>} : vector<8x8xf32>, vector<8x128xf32>, vector<8x128xf32> -> vector<8x128xf32>
    %106 = arith.addf %101, %105 : vector<8x128xf32>
    %c20 = arith.constant 20 : index
    %c0_72 = arith.constant 0 : index
    %c0_73 = arith.constant 0 : index
    %107 = vector.load %arg5[%c20, %c0_72, %c0_73] : memref<27x8x8xf32, #tpu.memory_space<vmem>>, vector<1x8x8xf32>
    %108 = vector.shape_cast %107 : vector<1x8x8xf32> to vector<8x8xf32>
    %109 = vector.extract_strided_slice %96 {offsets = [0, 2], sizes = [8, 128], strides = [1, 1]} : vector<8x256xf32> to vector<8x128xf32>
    %cst_74 = arith.constant dense<0.000000e+00> : vector<8x128xf32>
    %110 = tpu.matmul %108, %109, %cst_74 {dimension_numbers = #tpu.dot_dimension_numbers<[1], [0], [0], [1], [0, 0, 1, 1], [], []>} : vector<8x8xf32>, vector<8x128xf32>, vector<8x128xf32> -> vector<8x128xf32>
    %111 = arith.addf %106, %110 : vector<8x128xf32>
    %c21 = arith.constant 21 : index
    %c0_75 = arith.constant 0 : index
    %c0_76 = arith.constant 0 : index
    %112 = vector.load %arg5[%c21, %c0_75, %c0_76] : memref<27x8x8xf32, #tpu.memory_space<vmem>>, vector<1x8x8xf32>
    %113 = vector.shape_cast %112 : vector<1x8x8xf32> to vector<8x8xf32>
    %114 = vector.extract_strided_slice %96 {offsets = [0, 10], sizes = [8, 128], strides = [1, 1]} : vector<8x256xf32> to vector<8x128xf32>
    %cst_77 = arith.constant dense<0.000000e+00> : vector<8x128xf32>
    %115 = tpu.matmul %113, %114, %cst_77 {dimension_numbers = #tpu.dot_dimension_numbers<[1], [0], [0], [1], [0, 0, 1, 1], [], []>} : vector<8x8xf32>, vector<8x128xf32>, vector<8x128xf32> -> vector<8x128xf32>
    %116 = arith.addf %111, %115 : vector<8x128xf32>
    %c22 = arith.constant 22 : index
    %c0_78 = arith.constant 0 : index
    %c0_79 = arith.constant 0 : index
    %117 = vector.load %arg5[%c22, %c0_78, %c0_79] : memref<27x8x8xf32, #tpu.memory_space<vmem>>, vector<1x8x8xf32>
    %118 = vector.shape_cast %117 : vector<1x8x8xf32> to vector<8x8xf32>
    %119 = vector.extract_strided_slice %96 {offsets = [0, 11], sizes = [8, 128], strides = [1, 1]} : vector<8x256xf32> to vector<8x128xf32>
    %cst_80 = arith.constant dense<0.000000e+00> : vector<8x128xf32>
    %120 = tpu.matmul %118, %119, %cst_80 {dimension_numbers = #tpu.dot_dimension_numbers<[1], [0], [0], [1], [0, 0, 1, 1], [], []>} : vector<8x8xf32>, vector<8x128xf32>, vector<8x128xf32> -> vector<8x128xf32>
    %121 = arith.addf %116, %120 : vector<8x128xf32>
    %c23 = arith.constant 23 : index
    %c0_81 = arith.constant 0 : index
    %c0_82 = arith.constant 0 : index
    %122 = vector.load %arg5[%c23, %c0_81, %c0_82] : memref<27x8x8xf32, #tpu.memory_space<vmem>>, vector<1x8x8xf32>
    %123 = vector.shape_cast %122 : vector<1x8x8xf32> to vector<8x8xf32>
    %124 = vector.extract_strided_slice %96 {offsets = [0, 12], sizes = [8, 128], strides = [1, 1]} : vector<8x256xf32> to vector<8x128xf32>
    %cst_83 = arith.constant dense<0.000000e+00> : vector<8x128xf32>
    %125 = tpu.matmul %123, %124, %cst_83 {dimension_numbers = #tpu.dot_dimension_numbers<[1], [0], [0], [1], [0, 0, 1, 1], [], []>} : vector<8x8xf32>, vector<8x128xf32>, vector<8x128xf32> -> vector<8x128xf32>
    %126 = arith.addf %121, %125 : vector<8x128xf32>
    %c24 = arith.constant 24 : index
    %c0_84 = arith.constant 0 : index
    %c0_85 = arith.constant 0 : index
    %127 = vector.load %arg5[%c24, %c0_84, %c0_85] : memref<27x8x8xf32, #tpu.memory_space<vmem>>, vector<1x8x8xf32>
    %128 = vector.shape_cast %127 : vector<1x8x8xf32> to vector<8x8xf32>
    %129 = vector.extract_strided_slice %96 {offsets = [0, 20], sizes = [8, 128], strides = [1, 1]} : vector<8x256xf32> to vector<8x128xf32>
    %cst_86 = arith.constant dense<0.000000e+00> : vector<8x128xf32>
    %130 = tpu.matmul %128, %129, %cst_86 {dimension_numbers = #tpu.dot_dimension_numbers<[1], [0], [0], [1], [0, 0, 1, 1], [], []>} : vector<8x8xf32>, vector<8x128xf32>, vector<8x128xf32> -> vector<8x128xf32>
    %131 = arith.addf %126, %130 : vector<8x128xf32>
    %c25 = arith.constant 25 : index
    %c0_87 = arith.constant 0 : index
    %c0_88 = arith.constant 0 : index
    %132 = vector.load %arg5[%c25, %c0_87, %c0_88] : memref<27x8x8xf32, #tpu.memory_space<vmem>>, vector<1x8x8xf32>
    %133 = vector.shape_cast %132 : vector<1x8x8xf32> to vector<8x8xf32>
    %134 = vector.extract_strided_slice %96 {offsets = [0, 21], sizes = [8, 128], strides = [1, 1]} : vector<8x256xf32> to vector<8x128xf32>
    %cst_89 = arith.constant dense<0.000000e+00> : vector<8x128xf32>
    %135 = tpu.matmul %133, %134, %cst_89 {dimension_numbers = #tpu.dot_dimension_numbers<[1], [0], [0], [1], [0, 0, 1, 1], [], []>} : vector<8x8xf32>, vector<8x128xf32>, vector<8x128xf32> -> vector<8x128xf32>
    %136 = arith.addf %131, %135 : vector<8x128xf32>
    %c26 = arith.constant 26 : index
    %c0_90 = arith.constant 0 : index
    %c0_91 = arith.constant 0 : index
    %137 = vector.load %arg5[%c26, %c0_90, %c0_91] : memref<27x8x8xf32, #tpu.memory_space<vmem>>, vector<1x8x8xf32>
    %138 = vector.shape_cast %137 : vector<1x8x8xf32> to vector<8x8xf32>
    %139 = vector.extract_strided_slice %96 {offsets = [0, 22], sizes = [8, 128], strides = [1, 1]} : vector<8x256xf32> to vector<8x128xf32>
    %cst_92 = arith.constant dense<0.000000e+00> : vector<8x128xf32>
    %140 = tpu.matmul %138, %139, %cst_92 {dimension_numbers = #tpu.dot_dimension_numbers<[1], [0], [0], [1], [0, 0, 1, 1], [], []>} : vector<8x8xf32>, vector<8x128xf32>, vector<8x128xf32> -> vector<8x128xf32>
    %141 = arith.addf %136, %140 : vector<8x128xf32>
    %c0_93 = arith.constant 0 : index
    %c0_94 = arith.constant 0 : index
    %c0_95 = arith.constant 0 : index
    %c0_96 = arith.constant 0 : index
    %142 = vector.load %arg6[%c0_93, %c0_94, %c0_95, %c0_96] : memref<1x1x8x128xf32, #tpu.memory_space<vmem>>, vector<1x1x8x128xf32>
    %143 = vector.shape_cast %142 : vector<1x1x8x128xf32> to vector<8x128xf32>
    %144 = vector.shape_cast %141 : vector<8x128xf32> to vector<1x1x8x128xf32>
    tpu.vector_store %arg6[%c0_93, %c0_94, %c0_95, %c0_96], %144 {strides = array<i32>} : memref<1x1x8x128xf32, #tpu.memory_space<vmem>>, vector<1x1x8x128xf32>,
    return
  }
  func.func @transform_0(%arg0: i32, %arg1: i32) -> (i32, i32, i32, i32) {
    %c0_i32 = arith.constant 0 : i32
    %0 = arith.addi %arg1, %c0_i32 : i32
    %c0_i32_0 = arith.constant 0 : i32
    %c0_i32_1 = arith.constant 0 : i32
    %c0_i32_2 = arith.constant 0 : i32
    return %arg0, %0, %c0_i32_0, %c0_i32_1 : i32, i32, i32, i32
  }
  func.func @transform_1(%arg0: i32, %arg1: i32) -> (i32, i32, i32, i32) {
    %c1_i32 = arith.constant 1 : i32
    %0 = arith.addi %arg1, %c1_i32 : i32
    %c0_i32 = arith.constant 0 : i32
    %c0_i32_0 = arith.constant 0 : i32
    %c0_i32_1 = arith.constant 0 : i32
    return %arg0, %0, %c0_i32, %c0_i32_0 : i32, i32, i32, i32
  }
  func.func @transform_2(%arg0: i32, %arg1: i32) -> (i32, i32, i32, i32) {
    %c2_i32 = arith.constant 2 : i32
    %0 = arith.addi %arg1, %c2_i32 : i32
    %c0_i32 = arith.constant 0 : i32
    %c0_i32_0 = arith.constant 0 : i32
    %c0_i32_1 = arith.constant 0 : i32
    return %arg0, %0, %c0_i32, %c0_i32_0 : i32, i32, i32, i32
  }
  func.func @transform_3(%arg0: i32, %arg1: i32) -> (i32, i32, i32) {
    %c0_i32 = arith.constant 0 : i32
    %c0_i32_0 = arith.constant 0 : i32
    %c0_i32_1 = arith.constant 0 : i32
    %c0_i32_2 = arith.constant 0 : i32
    return %c0_i32, %c0_i32_0, %c0_i32_1 : i32, i32, i32
  }
  func.func @transform_4(%arg0: i32, %arg1: i32) -> (i32, i32, i32, i32) {
    %c0_i32 = arith.constant 0 : i32
    %c0_i32_0 = arith.constant 0 : i32
    %c0_i32_1 = arith.constant 0 : i32
    return %arg0, %arg1, %c0_i32, %c0_i32_0 : i32, i32, i32, i32
  }
}

</mosaic_0001>

<llo_original>
// kernel: tpu_custom_call.1
$region0: #{tpu_custom_call.1}
  #allocation0 [shape = 'u32[]', space=smem, size = 0x4, offset = 0x4, fixed_abs, tag = 'smem constant byte address 0x4 - core index']
  #allocation1 [shape = 'u32[144,128]{1,0:T(1,128)}', space=vmem, size = 0x12000, scoped, tag = 'internal scratch']
  %s0 = inlined_call_operand.hbm [shape: f32[2,10,8,256], index: 0, kind: input, shape index: {}]
  %s1 = inlined_call_operand.hbm [shape: f32[2,10,8,256], index: 1, kind: input, shape index: {}]
  %s2 = inlined_call_operand.hbm [shape: f32[2,10,8,256], index: 2, kind: input, shape index: {}]
  %s3 = inlined_call_operand.vmem [shape: f32[27,8,8], index: 3, kind: input, shape index: {}]
  %s4 = inlined_call_operand.hbm [shape: f32[2,8,8,128], index: 4, kind: output, shape index: {}]
  %s5 = sld [smem:[#allocation0]]
  $region61: #{tpu_custom_call.1} parent=0
    _
  %s7 = ssub.s32 1, %s5
  %s8 = scalar_select 0, %s7, %s5
  $region1: #{tpu_custom_call.1} parent=0
    #allocation2 [shape = 'u8[16384]{0}', space=vmem, size = 0x4000, scoped, tag = 'input window, operand 0']
    #allocation3 [shape = 's32[2]{0}', space=sflag, size = 0x8, scoped, tag = 'scoped memory for tpu_custom_call.1']
    #allocation4 [shape = 's32[2]{0}', space=sflag, size = 0x8, scoped, tag = 'scoped memory for tpu_custom_call.1']
    #allocation5 [shape = 'u8[16384]{0}', space=vmem, size = 0x4000, scoped, tag = 'input window, operand 1']
    #allocation6 [shape = 's32[2]{0}', space=sflag, size = 0x8, scoped, tag = 'scoped memory for tpu_custom_call.1']
    #allocation7 [shape = 'u8[16384]{0}', space=vmem, size = 0x4000, scoped, tag = 'input window, operand 2']
    #allocation8 [shape = 'u8[8192]{0}', space=vmem, size = 0x2000, scoped, tag = 'output window, operand 0']
    %9 = vsyncpa [#allocation3], 0
    %s10 = scalar_lea.sflag [#allocation3], 1
    %11 = vsyncpa %s10, 0
    %12 = vsyncpa [#allocation6], 0
    %s13 = scalar_lea.sflag [#allocation6], 1
    %14 = vsyncpa %s13, 0
    %15 = vsyncpa [#allocation4], 0
    %s16 = scalar_lea.sflag [#allocation4], 1
    %17 = vsyncpa %s16, 0
    loop: start=0, step=1, limit=18
    $region2: #{tpu_custom_call.1} parent=1 // loop_pre_header
      _
    $region3: #{tpu_custom_call.1} parent=1 // loop_header
      %s19 = sphi 0, %s23
      %p20 = scmp.ge.s32.totalorder %s19, 18
      %s26 = sphi 0, %s38
      %s27 = sphi 0, %s34
      %s28 = sphi 0, %s26
      %s29 = sphi 0, %s27
      %s30 = sphi 0, %s28
      %s31 = sphi 0, %s29
      %s43 = sphi 0, %s45
      %s46 = sphi 0, %s43
      %s47 = sphi 0, %s46
      %s63 = sphi 0, %s47
      %s73 = sphi 0, %s75
      %s76 = sphi 0, %s73
      %s77 = sphi 0, %s76
      %s93 = sphi 0, %s77
      %s103 = sphi 0, %s105
      %s106 = sphi 0, %s103
      %s107 = sphi 0, %s106
      %s123 = sphi 0, %s107
      %s127 = sphi 0, %s127
      %s129 = sphi 0, %s127
      %s130 = sphi 0, %s129
      %s144 = sphi 0, %s130
      %s152 = sphi 0, %s154
      %s155 = sphi 0, %s152
      %s156 = sphi 0, %s155
      %s172 = sphi 0, %s156
    $region4: #{tpu_custom_call.1} parent=1 // loop_header_branch
      %22 = sbr.rel (%p20) target = $region8
    $region5: #{tpu_custom_call.1} parent=1 // loop_body
      %s24 = ssub.s32 %s19, 1
      %s25 = ssub.s32 %s19, 2
      %s32 = sadd.s32 1, %s27
      %p33 = scmp.ge.s32.totalorder %s32, 8
      %s34 = scalar_select %p33, 0, %s32
      %s35 = sadd.s32 1, %s26
      %s36 = scalar_select %p33, %s35, %s26
      %p37 = scmp.ge.s32.totalorder %s36, 2
      %s38 = scalar_select %p37, 0, %s36
      %s39 = ssub.s32 %s26, %s38
      %s40 = ssub.s32 %s27, %s34
      %s41 = sor.u32 %s39, %s40
      %p42 = scmp.eq.s32.totalorder %s41, 0
      %s44 = sadd.s32 %s43, 1
      %s45 = scalar_select %p42, %s43, %s44
      %p48 = pneg %p42
      %p49 = scmp.eq.s32.totalorder %s19, 15
      %p50 = por %p48, %p49
      %p51 = scmp.ne.s32.totalorder %s43, %s46
      %p52 = scmp.eq.s32.totalorder %s19, 0
      %p53 = por %p51, %p52
      %p54 = scmp.ne.s32.totalorder %s43, %s46
      %p55 = scmp.eq.s32.totalorder %s24, 15
      %p56 = por %p54, %p55
      %p57 = scmp.ne.s32.totalorder %s46, %s47
      %p58 = scmp.eq.s32.totalorder %s24, 0
      %p59 = por %p57, %p58
      %p60 = scmp.ne.s32.totalorder %s46, %s47
      %p61 = scmp.eq.s32.totalorder %s25, 15
      %p62 = por %p60, %p61
      %p64 = scmp.ne.s32.totalorder %s47, %s63
      %p65 = scmp.eq.s32.totalorder %s25, 0
      %p66 = por %p64, %p65
      %s67 = sadd.s32 %s27, 1
      %s68 = sadd.s32 %s34, 1
      %s69 = ssub.s32 %s26, %s38
      %s70 = ssub.s32 %s67, %s68
      %s71 = sor.u32 %s69, %s70
      %p72 = scmp.eq.s32.totalorder %s71, 0
      %s74 = sadd.s32 %s73, 1
      %s75 = scalar_select %p72, %s73, %s74
      %p78 = pneg %p72
      %p79 = scmp.eq.s32.totalorder %s19, 15
      %p80 = por %p78, %p79
      %p81 = scmp.ne.s32.totalorder %s73, %s76
      %p82 = scmp.eq.s32.totalorder %s19, 0
      %p83 = por %p81, %p82
      %p84 = scmp.ne.s32.totalorder %s73, %s76
      %p85 = scmp.eq.s32.totalorder %s24, 15
      %p86 = por %p84, %p85
      %p87 = scmp.ne.s32.totalorder %s76, %s77
      %p88 = scmp.eq.s32.totalorder %s24, 0
      %p89 = por %p87, %p88
      %p90 = scmp.ne.s32.totalorder %s76, %s77
      %p91 = scmp.eq.s32.totalorder %s25, 15
      %p92 = por %p90, %p91
      %p94 = scmp.ne.s32.totalorder %s77, %s93
      %p95 = scmp.eq.s32.totalorder %s25, 0
      %p96 = por %p94, %p95
      %s97 = sadd.s32 %s27, 2
      %s98 = sadd.s32 %s34, 2
      %s99 = ssub.s32 %s26, %s38
      %s100 = ssub.s32 %s97, %s98
      %s101 = sor.u32 %s99, %s100
      %p102 = scmp.eq.s32.totalorder %s101, 0
      %s104 = sadd.s32 %s103, 1
      %s105 = scalar_select %p102, %s103, %s104
      %p108 = pneg %p102
      %p109 = scmp.eq.s32.totalorder %s19, 15
      %p110 = por %p108, %p109
      %p111 = scmp.ne.s32.totalorder %s103, %s106
      %p112 = scmp.eq.s32.totalorder %s19, 0
      %p113 = por %p111, %p112
      %p114 = scmp.ne.s32.totalorder %s103, %s106
      %p115 = scmp.eq.s32.totalorder %s24, 15
      %p116 = por %p114, %p115
      %p117 = scmp.ne.s32.totalorder %s106, %s107
      %p118 = scmp.eq.s32.totalorder %s24, 0
      %p119 = por %p117, %p118
      %p120 = scmp.ne.s32.totalorder %s106, %s107
      %p121 = scmp.eq.s32.totalorder %s25, 15
      %p122 = por %p120, %p121
      %p124 = scmp.ne.s32.totalorder %s107, %s123
      %p125 = scmp.eq.s32.totalorder %s25, 0
      %p126 = por %p124, %p125
      %s128 = sadd.s32 %s127, 1
      %p131 = scmp.eq.s32.totalorder %s19, 15
      %p132 = scmp.ne.s32.totalorder %s127, %s129
      %p133 = scmp.eq.s32.totalorder %s19, 0
      %p134 = por %p132, %p133
      %p135 = scmp.ne.s32.totalorder %s127, %s129
      %p136 = scmp.eq.s32.totalorder %s24, 15
      %p137 = por %p135, %p136
      %p138 = scmp.ne.s32.totalorder %s129, %s130
      %p139 = scmp.eq.s32.totalorder %s24, 0
      %p140 = por %p138, %p139
      %p141 = scmp.ne.s32.totalorder %s129, %s130
      %p142 = scmp.eq.s32.totalorder %s25, 15
      %p143 = por %p141, %p142
      %p145 = scmp.ne.s32.totalorder %s130, %s144
      %p146 = scmp.eq.s32.totalorder %s25, 0
      %p147 = por %p145, %p146
      %s148 = ssub.s32 %s26, %s38
      %s149 = ssub.s32 %s27, %s34
      %s150 = sor.u32 %s148, %s149
      %p151 = scmp.eq.s32.totalorder %s150, 0
      %s153 = sadd.s32 %s152, 1
      %s154 = scalar_select %p151, %s152, %s153
      %p157 = pneg %p151
      %p158 = scmp.eq.s32.totalorder %s19, 15
      %p159 = por %p157, %p158
      %p160 = scmp.ne.s32.totalorder %s152, %s155
      %p161 = scmp.eq.s32.totalorder %s19, 0
      %p162 = por %p160, %p161
      %p163 = scmp.ne.s32.totalorder %s152, %s155
      %p164 = scmp.eq.s32.totalorder %s24, 15
      %p165 = por %p163, %p164
      %p166 = scmp.ne.s32.totalorder %s155, %s156
      %p167 = scmp.eq.s32.totalorder %s24, 0
      %p168 = por %p166, %p167
      %p169 = scmp.ne.s32.totalorder %s155, %s156
      %p170 = scmp.eq.s32.totalorder %s25, 15
      %p171 = por %p169, %p170
      %p173 = scmp.ne.s32.totalorder %s156, %s172
      %p174 = scmp.eq.s32.totalorder %s25, 0
      %p175 = por %p173, %p174
      %p176 = scmp.le.s32.totalorder 1, %s19
      %p177 = scmp.lt.s32.totalorder %s19, 17
      %p178 = pnand %p176, %p177
      %p179 = pneg %p178
      // Predicated region
      $region9: #{tpu_custom_call.1} parent=5 // pred_check
        _
      $region10: #{tpu_custom_call.1} parent=5 // pred_check_branch
        %181 = sbr.rel (%p178) target = $region12
      $region11: #{tpu_custom_call.1} parent=5 // pred_region
        %s182 = ssub.s32 %s19, 1
        // Predicated region
        $region13: #{tpu_custom_call.1} parent=11 // pred_check
          %p183 = pneg %p140
        $region14: #{tpu_custom_call.1} parent=11 // pred_check_branch
          %185 = sbr.rel (%p183) target = $region16
        $region15: #{tpu_custom_call.1} parent=11 // pred_region
          _
        $region16: #{tpu_custom_call.1} parent=11 // pred_fallthru
          _
      $region12: #{tpu_custom_call.1} parent=5 // pred_fallthru
        _
      %p186 = scmp.lt.s32.totalorder %s19, 16
      // Predicated region
      $region17: #{tpu_custom_call.1} parent=5 // pred_check
        %p187 = pneg %p186
      $region18: #{tpu_custom_call.1} parent=5 // pred_check_branch
        %189 = sbr.rel (%p187) target = $region20
      $region19: #{tpu_custom_call.1} parent=5 // pred_region
        // Predicated region
        $region21: #{tpu_custom_call.1} parent=19 // pred_check
          %p190 = pneg %p53
        $region22: #{tpu_custom_call.1} parent=19 // pred_check_branch
          %192 = sbr.rel (%p190) target = $region24
        $region23: #{tpu_custom_call.1} parent=19 // pred_region
          %s193 = sand.u32 %s43, 1
          %s194 = scalar_lea.sflag [#allocation3], %s193
          %s195 = sand.u32 %s43, 1
          %s196 = smul.addr %s195, 16
          %s197 = scalar_lea.vmem [#allocation2], %s196
          %s199 = ssub.s32 256, 256
          %200 = vsyncadd %s194, %s199
          %s201 = smul.addr %s27, 2
          %s202 = smul.addr %s26, 20
          %s203 = sadd.s32 %s201, %s202
          %s204 = smul.addr %s203, 128
          %s205 = scalar_lea.hbm %s0, %s204
          %s207 = sshll.u32 %s197, 4
          %s208 = int_to_ptr.vmem [resolvable:$true] %s207
          %210 = dma.hbm_to_vmem [thread:$0]  %s205, 256, %s208, %s194
        $region24: #{tpu_custom_call.1} parent=19 // pred_fallthru
          _
        // Predicated region
        $region25: #{tpu_custom_call.1} parent=19 // pred_check
          %p211 = pneg %p83
        $region26: #{tpu_custom_call.1} parent=19 // pred_check_branch
          %213 = sbr.rel (%p211) target = $region28
        $region27: #{tpu_custom_call.1} parent=19 // pred_region
          %s214 = sand.u32 %s19, 1
          %s215 = scalar_lea.sflag [#allocation6], %s214
          %s216 = sand.u32 %s73, 1
          %s217 = smul.addr %s216, 16
          %s218 = scalar_lea.vmem [#allocation5], %s217
          %s219 = sadd.s32 %s27, 1
          %s221 = ssub.s32 256, 256
          %222 = vsyncadd %s215, %s221
          %s223 = smul.addr %s219, 2
          %s224 = smul.addr %s26, 20
          %s225 = sadd.s32 %s223, %s224
          %s226 = smul.addr %s225, 128
          %s227 = scalar_lea.hbm %s1, %s226
          %s229 = sshll.u32 %s218, 4
          %s230 = int_to_ptr.vmem [resolvable:$true] %s229
          %232 = dma.hbm_to_vmem [thread:$0]  %s227, 256, %s230, %s215
        $region28: #{tpu_custom_call.1} parent=19 // pred_fallthru
          _
        // Predicated region
        $region29: #{tpu_custom_call.1} parent=19 // pred_check
          %p233 = pneg %p113
        $region30: #{tpu_custom_call.1} parent=19 // pred_check_branch
          %235 = sbr.rel (%p233) target = $region32
        $region31: #{tpu_custom_call.1} parent=19 // pred_region
          %s236 = sand.u32 %s19, 1
          %s237 = scalar_lea.sflag [#allocation6], %s236
          %s238 = sand.u32 %s103, 1
          %s239 = smul.addr %s238, 16
          %s240 = scalar_lea.vmem [#allocation7], %s239
          %s241 = sadd.s32 %s27, 2
          %s243 = ssub.s32 256, 256
          %244 = vsyncadd %s237, %s243
          %s245 = smul.addr %s241, 2
          %s246 = smul.addr %s26, 20
          %s247 = sadd.s32 %s245, %s246
          %s248 = smul.addr %s247, 128
          %s249 = scalar_lea.hbm %s2, %s248
          %s251 = sshll.u32 %s240, 4
          %s252 = int_to_ptr.vmem [resolvable:$true] %s251
          %254 = dma.hbm_to_vmem [thread:$0]  %s249, 256, %s252, %s237
        $region32: #{tpu_custom_call.1} parent=19 // pred_fallthru
          _
      $region20: #{tpu_custom_call.1} parent=5 // pred_fallthru
        _
      %p255 = scmp.le.s32.totalorder 1, %s19
      %p256 = scmp.lt.s32.totalorder %s19, 17
      %p257 = pnand %p255, %p256
      %p258 = pneg %p257
      // Predicated region
      $region33: #{tpu_custom_call.1} parent=5 // pred_check
        _
      $region34: #{tpu_custom_call.1} parent=5 // pred_check_branch
        %260 = sbr.rel (%p257) target = $region36
      $region35: #{tpu_custom_call.1} parent=5 // pred_region
        %s261 = ssub.s32 %s19, 1
        %s262 = sand.u32 %s46, 1
        %s263 = scalar_lea.sflag [#allocation3], %s262
        %s264 = sand.u32 %s46, 1
        %s265 = smul.addr %s264, 16
        %s266 = scalar_lea.vmem [#allocation2], %s265
        // Predicated region
        $region37: #{tpu_custom_call.1} parent=35 // pred_check
          %p267 = pneg %p59
        $region38: #{tpu_custom_call.1} parent=35 // pred_check_branch
          %269 = sbr.rel (%p267) target = $region40
        $region39: #{tpu_custom_call.1} parent=35 // pred_region
          %270 = dma.done %s263, 256
        $region40: #{tpu_custom_call.1} parent=35 // pred_fallthru
          _
        %s271 = sand.u32 %s24, 1
        %s272 = scalar_lea.sflag [#allocation6], %s271
        %s273 = sand.u32 %s76, 1
        %s274 = smul.addr %s273, 16
        %s275 = scalar_lea.vmem [#allocation5], %s274
        // Predicated region
        $region41: #{tpu_custom_call.1} parent=35 // pred_check
          %p276 = pneg %p89
        $region42: #{tpu_custom_call.1} parent=35 // pred_check_branch
          %278 = sbr.rel (%p276) target = $region44
        $region43: #{tpu_custom_call.1} parent=35 // pred_region
          %279 = dma.done %s272, 256
        $region44: #{tpu_custom_call.1} parent=35 // pred_fallthru
          _
        %s280 = sand.u32 %s24, 1
        %s281 = scalar_lea.sflag [#allocation6], %s280
        %s282 = sand.u32 %s106, 1
        %s283 = smul.addr %s282, 16
        %s284 = scalar_lea.vmem [#allocation7], %s283
        // Predicated region
        $region45: #{tpu_custom_call.1} parent=35 // pred_check
          %p285 = pneg %p119
        $region46: #{tpu_custom_call.1} parent=35 // pred_check_branch
          %287 = sbr.rel (%p285) target = $region48
        $region47: #{tpu_custom_call.1} parent=35 // pred_region
          %288 = dma.done %s281, 256
        $region48: #{tpu_custom_call.1} parent=35 // pred_fallthru
          _
        %s289 = sand.u32 %s46, 1
        %s290 = scalar_lea.sflag [#allocation3], %s289
        %s291 = sand.u32 %s46, 1
        %s292 = smul.addr %s291, 16
        %s293 = scalar_lea.vmem [#allocation2], %s292
        %p294 = pneg %p59
        %p295 = pneg %p56
        %s296 = sand.u32 %s24, 1
        %s297 = scalar_lea.sflag [#allocation6], %s296
        %s298 = sand.u32 %s76, 1
        %s299 = smul.addr %s298, 16
        %s300 = scalar_lea.vmem [#allocation5], %s299
        %p301 = pneg %p89
        %p302 = pneg %p86
        %s303 = sand.u32 %s24, 1
        %s304 = scalar_lea.sflag [#allocation6], %s303
        %s305 = sand.u32 %s106, 1
        %s306 = smul.addr %s305, 16
        %s307 = scalar_lea.vmem [#allocation7], %s306
        %p308 = pneg %p119
        %p309 = pneg %p116
        %p310 = pneg %p140
        %p311 = pneg %p137
        %p312 = pneg %p168
        %p313 = pneg %p165
        %s314 = sand.u32 %s155, 1
        %s315 = scalar_lea.sflag [#allocation4], %s314
        %s316 = sand.u32 %s155, 1
        %s317 = smul.addr %s316, 8
        %s318 = scalar_lea.vmem [#allocation8], %s317
        %s319 = sadd.s32 %s29, 1
        %s320 = sadd.s32 %s29, 2
        %v321 = vld [vmem:[%s266] sm:$0xff]
        %v322 = vld [vmem:[%s266 + $0x8] sm:$0xff]
        %v323 = vld [vmem:[%s3] sm:$0xff]
        %s324 = scalar_lea.vmem %s3, 8
        %v325 = vld [vmem:[%s324] sm:$0xff]
        %328 = vrot.lane.b32.xlu0 %v321, 127
        %v329 = vpop.permute.xlu0 %328
        %330 = vrot.lane.b32.xlu0 %v322, 127
        %v331 = vpop.permute.xlu0 %330
        %vm332 = vcmask 1039360
        %v333 = vsel %vm332, %v329, %v331
        %vm335 = vcmask 64512
        %v337 = vsel %vm335, %v325, 0
        %339 = vmatprep.subr.mxu0 0.0
        %340 = vmatpush1.msra.mxu0 %v333
        %341 = vmatprep.subr.mxu0 0.0
        %342 = vmatpush1.msra.mxu0 0.0
        %343 = vmatprep.subr.mxu0 0.0
        %344 = vmatpush1.msra.mxu0 0.0
        %345 = vmatprep.subr.mxu0 0.0
        %346 = vmatpush1.msra.mxu0 0.0
        %347 = vmatprep.subr.mxu0 0.0
        %348 = vmatpush1.msra.mxu0 0.0
        %349 = vmatprep.subr.mxu0 0.0
        %350 = vmatpush1.msra.mxu0 0.0
        %351 = vmatprep.subr.mxu0 0.0
        %352 = vmatpush1.msra.mxu0 0.0
        %353 = vmatprep.subr.mxu0 0.0
        %354 = vmatpush1.msra.mxu0 0.0
        %355 = vmatprep.subr.mxu0 0.0
        %356 = vmatpush1.msra.mxu0 0.0
        %357 = vmatprep.subr.mxu0 0.0
        %358 = vmatpush1.msra.mxu0 0.0
        %359 = vmatprep.subr.mxu0 0.0
        %360 = vmatpush1.msra.mxu0 0.0
        %361 = vmatprep.subr.mxu0 0.0
        %362 = vmatpush1.msra.mxu0 0.0
        %363 = vmatprep.subr.mxu0 0.0
        %364 = vmatpush1.msra.mxu0 0.0
        %365 = vmatprep.subr.mxu0 0.0
        %366 = vmatpush1.msra.mxu0 0.0
        %367 = vmatprep.subr.mxu0 0.0
        %368 = vmatpush1.msra.mxu0 0.0
        %369 = vmatprep.subr.mxu0 0.0
        %370 = vmatpush1.msra.mxu0 0.0
        %371 = vmatprep.subr.mxu0 0.0
        %372 = vmatpush1.msra.mxu0 0.0
        %373 = vmatprep.subr.mxu0 0.0
        %374 = vmatpush1.msra.mxu0 0.0
        %375 = vmatprep.subr.mxu0 0.0
        %376 = vmatpush1.msra.mxu0 0.0
        %377 = vmatprep.subr.mxu0 0.0
        %378 = vmatpush1.msra.mxu0 0.0
        %379 = vmatprep.subr.mxu0 0.0
        %380 = vmatpush1.msra.mxu0 0.0
        %381 = vmatprep.subr.mxu0 0.0
        %382 = vmatpush1.msra.mxu0 0.0
        %383 = vmatprep.subr.mxu0 0.0
        %384 = vmatpush1.msra.mxu0 0.0
        %385 = vmatprep.subr.mxu0 0.0
        %386 = vmatpush1.msra.mxu0 0.0
        %387 = vmatprep.subr.mxu0 0.0
        %388 = vmatpush1.msra.mxu0 0.0
        %389 = vmatprep.subr.mxu0 0.0
        %390 = vmatpush1.msra.mxu0 0.0
        %391 = vmatprep.subr.mxu0 0.0
        %392 = vmatpush1.msra.mxu0 0.0
        %393 = vmatprep.subr.mxu0 0.0
        %394 = vmatpush1.msra.mxu0 0.0
        %395 = vmatprep.subr.mxu0 0.0
        %396 = vmatpush1.msra.mxu0 0.0
        %397 = vmatprep.subr.mxu0 0.0
        %398 = vmatpush1.msra.mxu0 0.0
        %399 = vmatprep.subr.mxu0 0.0
        %400 = vmatpush1.msra.mxu0 0.0
        %401 = vmatprep.subr.mxu0 0.0
        %402 = vmatpush1.msra.mxu0 0.0
        %403 = vmatprep.mubr.f32.mxu0 0.0
        %404 = vmatmul.mubr.f32.gmra.mrb[0].mxu0 %v337
        %v405 = vpop.f32.mrb[0].mxu0
        %v406 = vadd.f32 0.0, %v405
        %v407 = vpop.f32.mrb[0].mxu0
        %408 = vdwg.mxu0
        %v410 = vsel %vm335, %v323, 0
        %412 = vmatprep.subr.mxu0 0.0
        %413 = vmatpush1.msra.mxu0 %v321
        %414 = vmatprep.subr.mxu0 0.0
        %415 = vmatpush1.msra.mxu0 0.0
        %416 = vmatprep.subr.mxu0 0.0
        %417 = vmatpush1.msra.mxu0 0.0
        %418 = vmatprep.subr.mxu0 0.0
        %419 = vmatpush1.msra.mxu0 0.0
        %420 = vmatprep.subr.mxu0 0.0
        %421 = vmatpush1.msra.mxu0 0.0
        %422 = vmatprep.subr.mxu0 0.0
        %423 = vmatpush1.msra.mxu0 0.0
        %424 = vmatprep.subr.mxu0 0.0
        %425 = vmatpush1.msra.mxu0 0.0
        %426 = vmatprep.subr.mxu0 0.0
        %427 = vmatpush1.msra.mxu0 0.0
        %428 = vmatprep.subr.mxu0 0.0
        %429 = vmatpush1.msra.mxu0 0.0
        %430 = vmatprep.subr.mxu0 0.0
        %431 = vmatpush1.msra.mxu0 0.0
        %432 = vmatprep.subr.mxu0 0.0
        %433 = vmatpush1.msra.mxu0 0.0
        %434 = vmatprep.subr.mxu0 0.0
        %435 = vmatpush1.msra.mxu0 0.0
        %436 = vmatprep.subr.mxu0 0.0
        %437 = vmatpush1.msra.mxu0 0.0
        %438 = vmatprep.subr.mxu0 0.0
        %439 = vmatpush1.msra.mxu0 0.0
        %440 = vmatprep.subr.mxu0 0.0
        %441 = vmatpush1.msra.mxu0 0.0
        %442 = vmatprep.subr.mxu0 0.0
        %443 = vmatpush1.msra.mxu0 0.0
        %444 = vmatprep.subr.mxu0 0.0
        %445 = vmatpush1.msra.mxu0 0.0
        %446 = vmatprep.subr.mxu0 0.0
        %447 = vmatpush1.msra.mxu0 0.0
        %448 = vmatprep.subr.mxu0 0.0
        %449 = vmatpush1.msra.mxu0 0.0
        %450 = vmatprep.subr.mxu0 0.0
        %451 = vmatpush1.msra.mxu0 0.0
        %452 = vmatprep.subr.mxu0 0.0
        %453 = vmatpush1.msra.mxu0 0.0
        %454 = vmatprep.subr.mxu0 0.0
        %455 = vmatpush1.msra.mxu0 0.0
        %456 = vmatprep.subr.mxu0 0.0
        %457 = vmatpush1.msra.mxu0 0.0
        %458 = vmatprep.subr.mxu0 0.0
        %459 = vmatpush1.msra.mxu0 0.0
        %460 = vmatprep.subr.mxu0 0.0
        %461 = vmatpush1.msra.mxu0 0.0
        %462 = vmatprep.subr.mxu0 0.0
        %463 = vmatpush1.msra.mxu0 0.0
        %464 = vmatprep.subr.mxu0 0.0
        %465 = vmatpush1.msra.mxu0 0.0
        %466 = vmatprep.subr.mxu0 0.0
        %467 = vmatpush1.msra.mxu0 0.0
        %468 = vmatprep.subr.mxu0 0.0
        %469 = vmatpush1.msra.mxu0 0.0
        %470 = vmatprep.subr.mxu0 0.0
        %471 = vmatpush1.msra.mxu0 0.0
        %472 = vmatprep.subr.mxu0 0.0
        %473 = vmatpush1.msra.mxu0 0.0
        %474 = vmatprep.subr.mxu0 0.0
        %475 = vmatpush1.msra.mxu0 0.0
        %476 = vmatprep.mubr.f32.mxu0 0.0
        %477 = vmatmul.mubr.f32.gmra.mrb[0].mxu0 %v410
        %v478 = vpop.f32.mrb[0].mxu0
        %v479 = vadd.f32 %v406, %v478
        %v480 = vpop.f32.mrb[0].mxu0
        %481 = vdwg.mxu0
        %s482 = scalar_lea.vmem %s3, 16
        %v483 = vld [vmem:[%s482] sm:$0xff]
        %484 = vrot.lane.b32.xlu0 %v321, 126
        %v485 = vpop.permute.xlu0 %484
        %486 = vrot.lane.b32.xlu0 %v322, 126
        %v487 = vpop.permute.xlu0 %486
        %vm488 = vcmask 1031168
        %v489 = vsel %vm488, %v485, %v487
        %v492 = vsel %vm335, %v483, 0
        %494 = vmatprep.subr.mxu0 0.0
        %495 = vmatpush1.msra.mxu0 %v489
        %496 = vmatprep.subr.mxu0 0.0
        %497 = vmatpush1.msra.mxu0 0.0
        %498 = vmatprep.subr.mxu0 0.0
        %499 = vmatpush1.msra.mxu0 0.0
        %500 = vmatprep.subr.mxu0 0.0
        %501 = vmatpush1.msra.mxu0 0.0
        %502 = vmatprep.subr.mxu0 0.0
        %503 = vmatpush1.msra.mxu0 0.0
        %504 = vmatprep.subr.mxu0 0.0
        %505 = vmatpush1.msra.mxu0 0.0
        %506 = vmatprep.subr.mxu0 0.0
        %507 = vmatpush1.msra.mxu0 0.0
        %508 = vmatprep.subr.mxu0 0.0
        %509 = vmatpush1.msra.mxu0 0.0
        %510 = vmatprep.subr.mxu0 0.0
        %511 = vmatpush1.msra.mxu0 0.0
        %512 = vmatprep.subr.mxu0 0.0
        %513 = vmatpush1.msra.mxu0 0.0
        %514 = vmatprep.subr.mxu0 0.0
        %515 = vmatpush1.msra.mxu0 0.0
        %516 = vmatprep.subr.mxu0 0.0
        %517 = vmatpush1.msra.mxu0 0.0
        %518 = vmatprep.subr.mxu0 0.0
        %519 = vmatpush1.msra.mxu0 0.0
        %520 = vmatprep.subr.mxu0 0.0
        %521 = vmatpush1.msra.mxu0 0.0
        %522 = vmatprep.subr.mxu0 0.0
        %523 = vmatpush1.msra.mxu0 0.0
        %524 = vmatprep.subr.mxu0 0.0
        %525 = vmatpush1.msra.mxu0 0.0
        %526 = vmatprep.subr.mxu0 0.0
        %527 = vmatpush1.msra.mxu0 0.0
        %528 = vmatprep.subr.mxu0 0.0
        %529 = vmatpush1.msra.mxu0 0.0
        %530 = vmatprep.subr.mxu0 0.0
        %531 = vmatpush1.msra.mxu0 0.0
        %532 = vmatprep.subr.mxu0 0.0
        %533 = vmatpush1.msra.mxu0 0.0
        %534 = vmatprep.subr.mxu0 0.0
        %535 = vmatpush1.msra.mxu0 0.0
        %536 = vmatprep.subr.mxu0 0.0
        %537 = vmatpush1.msra.mxu0 0.0
        %538 = vmatprep.subr.mxu0 0.0
        %539 = vmatpush1.msra.mxu0 0.0
        %540 = vmatprep.subr.mxu0 0.0
        %541 = vmatpush1.msra.mxu0 0.0
        %542 = vmatprep.subr.mxu0 0.0
        %543 = vmatpush1.msra.mxu0 0.0
        %544 = vmatprep.subr.mxu0 0.0
        %545 = vmatpush1.msra.mxu0 0.0
        %546 = vmatprep.subr.mxu0 0.0
        %547 = vmatpush1.msra.mxu0 0.0
        %548 = vmatprep.subr.mxu0 0.0
        %549 = vmatpush1.msra.mxu0 0.0
        %550 = vmatprep.subr.mxu0 0.0
        %551 = vmatpush1.msra.mxu0 0.0
        %552 = vmatprep.subr.mxu0 0.0
        %553 = vmatpush1.msra.mxu0 0.0
        %554 = vmatprep.subr.mxu0 0.0
        %555 = vmatpush1.msra.mxu0 0.0
        %556 = vmatprep.subr.mxu0 0.0
        %557 = vmatpush1.msra.mxu0 0.0
        %558 = vmatprep.mubr.f32.mxu0 0.0
        %559 = vmatmul.mubr.f32.gmra.mrb[0].mxu0 %v492
        %v560 = vpop.f32.mrb[0].mxu0
        %v561 = vadd.f32 0.0, %v560
        %v562 = vpop.f32.mrb[0].mxu0
        %563 = vdwg.mxu0
        %v564 = vadd.f32 %v479, %v561
        %s565 = scalar_lea.vmem %s3, 24
        %v566 = vld [vmem:[%s565] sm:$0xff]
        %567 = vrot.lane.b32.xlu0 %v321, 118
        %v568 = vpop.permute.xlu0 %567
        %569 = vrot.lane.b32.xlu0 %v322, 118
        %v570 = vpop.permute.xlu0 %569
        %vm571 = vcmask 965632
        %v572 = vsel %vm571, %v568, %v570
        %v575 = vsel %vm335, %v566, 0
        %577 = vmatprep.subr.mxu0 0.0
        %578 = vmatpush1.msra.mxu0 %v572
        %579 = vmatprep.subr.mxu0 0.0
        %580 = vmatpush1.msra.mxu0 0.0
        %581 = vmatprep.subr.mxu0 0.0
        %582 = vmatpush1.msra.mxu0 0.0
        %583 = vmatprep.subr.mxu0 0.0
        %584 = vmatpush1.msra.mxu0 0.0
        %585 = vmatprep.subr.mxu0 0.0
        %586 = vmatpush1.msra.mxu0 0.0
        %587 = vmatprep.subr.mxu0 0.0
        %588 = vmatpush1.msra.mxu0 0.0
        %589 = vmatprep.subr.mxu0 0.0
        %590 = vmatpush1.msra.mxu0 0.0
        %591 = vmatprep.subr.mxu0 0.0
        %592 = vmatpush1.msra.mxu0 0.0
        %593 = vmatprep.subr.mxu0 0.0
        %594 = vmatpush1.msra.mxu0 0.0
        %595 = vmatprep.subr.mxu0 0.0
        %596 = vmatpush1.msra.mxu0 0.0
        %597 = vmatprep.subr.mxu0 0.0
        %598 = vmatpush1.msra.mxu0 0.0
        %599 = vmatprep.subr.mxu0 0.0
        %600 = vmatpush1.msra.mxu0 0.0
        %601 = vmatprep.subr.mxu0 0.0
        %602 = vmatpush1.msra.mxu0 0.0
        %603 = vmatprep.subr.mxu0 0.0
        %604 = vmatpush1.msra.mxu0 0.0
        %605 = vmatprep.subr.mxu0 0.0
        %606 = vmatpush1.msra.mxu0 0.0
        %607 = vmatprep.subr.mxu0 0.0
        %608 = vmatpush1.msra.mxu0 0.0
        %609 = vmatprep.subr.mxu0 0.0
        %610 = vmatpush1.msra.mxu0 0.0
        %611 = vmatprep.subr.mxu0 0.0
        %612 = vmatpush1.msra.mxu0 0.0
        %613 = vmatprep.subr.mxu0 0.0
        %614 = vmatpush1.msra.mxu0 0.0
        %615 = vmatprep.subr.mxu0 0.0
        %616 = vmatpush1.msra.mxu0 0.0
        %617 = vmatprep.subr.mxu0 0.0
        %618 = vmatpush1.msra.mxu0 0.0
        %619 = vmatprep.subr.mxu0 0.0
        %620 = vmatpush1.msra.mxu0 0.0
        %621 = vmatprep.subr.mxu0 0.0
        %622 = vmatpush1.msra.mxu0 0.0
        %623 = vmatprep.subr.mxu0 0.0
        %624 = vmatpush1.msra.mxu0 0.0
        %625 = vmatprep.subr.mxu0 0.0
        %626 = vmatpush1.msra.mxu0 0.0
        %627 = vmatprep.subr.mxu0 0.0
        %628 = vmatpush1.msra.mxu0 0.0
        %629 = vmatprep.subr.mxu0 0.0
        %630 = vmatpush1.msra.mxu0 0.0
        %631 = vmatprep.subr.mxu0 0.0
        %632 = vmatpush1.msra.mxu0 0.0
        %633 = vmatprep.subr.mxu0 0.0
        %634 = vmatpush1.msra.mxu0 0.0
        %635 = vmatprep.subr.mxu0 0.0
        %636 = vmatpush1.msra.mxu0 0.0
        %637 = vmatprep.subr.mxu0 0.0
        %638 = vmatpush1.msra.mxu0 0.0
        %639 = vmatprep.subr.mxu0 0.0
        %640 = vmatpush1.msra.mxu0 0.0
        %641 = vmatprep.mubr.f32.mxu0 0.0
        %642 = vmatmul.mubr.f32.gmra.mrb[0].mxu0 %v575
        %v643 = vpop.f32.mrb[0].mxu0
        %v644 = vadd.f32 0.0, %v643
        %v645 = vpop.f32.mrb[0].mxu0
        %646 = vdwg.mxu0
        %v647 = vadd.f32 %v564, %v644
        %s648 = scalar_lea.vmem %s3, 32
        %v649 = vld [vmem:[%s648] sm:$0xff]
        %650 = vrot.lane.b32.xlu0 %v321, 117
        %v651 = vpop.permute.xlu0 %650
        %652 = vrot.lane.b32.xlu0 %v322, 117
        %v653 = vpop.permute.xlu0 %652
        %vm654 = vcmask 957440
        %v655 = vsel %vm654, %v651, %v653
        %v658 = vsel %vm335, %v649, 0
        %660 = vmatprep.subr.mxu0 0.0
        %661 = vmatpush1.msra.mxu0 %v655
        %662 = vmatprep.subr.mxu0 0.0
        %663 = vmatpush1.msra.mxu0 0.0
        %664 = vmatprep.subr.mxu0 0.0
        %665 = vmatpush1.msra.mxu0 0.0
        %666 = vmatprep.subr.mxu0 0.0
        %667 = vmatpush1.msra.mxu0 0.0
        %668 = vmatprep.subr.mxu0 0.0
        %669 = vmatpush1.msra.mxu0 0.0
        %670 = vmatprep.subr.mxu0 0.0
        %671 = vmatpush1.msra.mxu0 0.0
        %672 = vmatprep.subr.mxu0 0.0
        %673 = vmatpush1.msra.mxu0 0.0
        %674 = vmatprep.subr.mxu0 0.0
        %675 = vmatpush1.msra.mxu0 0.0
        %676 = vmatprep.subr.mxu0 0.0
        %677 = vmatpush1.msra.mxu0 0.0
        %678 = vmatprep.subr.mxu0 0.0
        %679 = vmatpush1.msra.mxu0 0.0
        %680 = vmatprep.subr.mxu0 0.0
        %681 = vmatpush1.msra.mxu0 0.0
        %682 = vmatprep.subr.mxu0 0.0
        %683 = vmatpush1.msra.mxu0 0.0
        %684 = vmatprep.subr.mxu0 0.0
        %685 = vmatpush1.msra.mxu0 0.0
        %686 = vmatprep.subr.mxu0 0.0
        %687 = vmatpush1.msra.mxu0 0.0
        %688 = vmatprep.subr.mxu0 0.0
        %689 = vmatpush1.msra.mxu0 0.0
        %690 = vmatprep.subr.mxu0 0.0
        %691 = vmatpush1.msra.mxu0 0.0
        %692 = vmatprep.subr.mxu0 0.0
        %693 = vmatpush1.msra.mxu0 0.0
        %694 = vmatprep.subr.mxu0 0.0
        %695 = vmatpush1.msra.mxu0 0.0
        %696 = vmatprep.subr.mxu0 0.0
        %697 = vmatpush1.msra.mxu0 0.0
        %698 = vmatprep.subr.mxu0 0.0
        %699 = vmatpush1.msra.mxu0 0.0
        %700 = vmatprep.subr.mxu0 0.0
        %701 = vmatpush1.msra.mxu0 0.0
        %702 = vmatprep.subr.mxu0 0.0
        %703 = vmatpush1.msra.mxu0 0.0
        %704 = vmatprep.subr.mxu0 0.0
        %705 = vmatpush1.msra.mxu0 0.0
        %706 = vmatprep.subr.mxu0 0.0
        %707 = vmatpush1.msra.mxu0 0.0
        %708 = vmatprep.subr.mxu0 0.0
        %709 = vmatpush1.msra.mxu0 0.0
        %710 = vmatprep.subr.mxu0 0.0
        %711 = vmatpush1.msra.mxu0 0.0
        %712 = vmatprep.subr.mxu0 0.0
        %713 = vmatpush1.msra.mxu0 0.0
        %714 = vmatprep.subr.mxu0 0.0
        %715 = vmatpush1.msra.mxu0 0.0
        %716 = vmatprep.subr.mxu0 0.0
        %717 = vmatpush1.msra.mxu0 0.0
        %718 = vmatprep.subr.mxu0 0.0
        %719 = vmatpush1.msra.mxu0 0.0
        %720 = vmatprep.subr.mxu0 0.0
        %721 = vmatpush1.msra.mxu0 0.0
        %722 = vmatprep.subr.mxu0 0.0
        %723 = vmatpush1.msra.mxu0 0.0
        %724 = vmatprep.mubr.f32.mxu0 0.0
        %725 = vmatmul.mubr.f32.gmra.mrb[0].mxu0 %v658
        %v726 = vpop.f32.mrb[0].mxu0
        %v727 = vadd.f32 0.0, %v726
        %v728 = vpop.f32.mrb[0].mxu0
        %729 = vdwg.mxu0
        %v730 = vadd.f32 %v647, %v727
        %s731 = scalar_lea.vmem %s3, 40
        %v732 = vld [vmem:[%s731] sm:$0xff]
        %733 = vrot.lane.b32.xlu0 %v321, 116
        %v734 = vpop.permute.xlu0 %733
        %735 = vrot.lane.b32.xlu0 %v322, 116
        %v736 = vpop.permute.xlu0 %735
        %vm737 = vcmask 949248
        %v738 = vsel %vm737, %v734, %v736
        %v741 = vsel %vm335, %v732, 0
        %743 = vmatprep.subr.mxu0 0.0
        %744 = vmatpush1.msra.mxu0 %v738
        %745 = vmatprep.subr.mxu0 0.0
        %746 = vmatpush1.msra.mxu0 0.0
        %747 = vmatprep.subr.mxu0 0.0
        %748 = vmatpush1.msra.mxu0 0.0
        %749 = vmatprep.subr.mxu0 0.0
        %750 = vmatpush1.msra.mxu0 0.0
        %751 = vmatprep.subr.mxu0 0.0
        %752 = vmatpush1.msra.mxu0 0.0
        %753 = vmatprep.subr.mxu0 0.0
        %754 = vmatpush1.msra.mxu0 0.0
        %755 = vmatprep.subr.mxu0 0.0
        %756 = vmatpush1.msra.mxu0 0.0
        %757 = vmatprep.subr.mxu0 0.0
        %758 = vmatpush1.msra.mxu0 0.0
        %759 = vmatprep.subr.mxu0 0.0
        %760 = vmatpush1.msra.mxu0 0.0
        %761 = vmatprep.subr.mxu0 0.0
        %762 = vmatpush1.msra.mxu0 0.0
        %763 = vmatprep.subr.mxu0 0.0
        %764 = vmatpush1.msra.mxu0 0.0
        %765 = vmatprep.subr.mxu0 0.0
        %766 = vmatpush1.msra.mxu0 0.0
        %767 = vmatprep.subr.mxu0 0.0
        %768 = vmatpush1.msra.mxu0 0.0
        %769 = vmatprep.subr.mxu0 0.0
        %770 = vmatpush1.msra.mxu0 0.0
        %771 = vmatprep.subr.mxu0 0.0
        %772 = vmatpush1.msra.mxu0 0.0
        %773 = vmatprep.subr.mxu0 0.0
        %774 = vmatpush1.msra.mxu0 0.0
        %775 = vmatprep.subr.mxu0 0.0
        %776 = vmatpush1.msra.mxu0 0.0
        %777 = vmatprep.subr.mxu0 0.0
        %778 = vmatpush1.msra.mxu0 0.0
        %779 = vmatprep.subr.mxu0 0.0
        %780 = vmatpush1.msra.mxu0 0.0
        %781 = vmatprep.subr.mxu0 0.0
        %782 = vmatpush1.msra.mxu0 0.0
        %783 = vmatprep.subr.mxu0 0.0
        %784 = vmatpush1.msra.mxu0 0.0
        %785 = vmatprep.subr.mxu0 0.0
        %786 = vmatpush1.msra.mxu0 0.0
        %787 = vmatprep.subr.mxu0 0.0
        %788 = vmatpush1.msra.mxu0 0.0
        %789 = vmatprep.subr.mxu0 0.0
        %790 = vmatpush1.msra.mxu0 0.0
        %791 = vmatprep.subr.mxu0 0.0
        %792 = vmatpush1.msra.mxu0 0.0
        %793 = vmatprep.subr.mxu0 0.0
        %794 = vmatpush1.msra.mxu0 0.0
        %795 = vmatprep.subr.mxu0 0.0
        %796 = vmatpush1.msra.mxu0 0.0
        %797 = vmatprep.subr.mxu0 0.0
        %798 = vmatpush1.msra.mxu0 0.0
        %799 = vmatprep.subr.mxu0 0.0
        %800 = vmatpush1.msra.mxu0 0.0
        %801 = vmatprep.subr.mxu0 0.0
        %802 = vmatpush1.msra.mxu0 0.0
        %803 = vmatprep.subr.mxu0 0.0
        %804 = vmatpush1.msra.mxu0 0.0
        %805 = vmatprep.subr.mxu0 0.0
        %806 = vmatpush1.msra.mxu0 0.0
        %807 = vmatprep.mubr.f32.mxu0 0.0
        %808 = vmatmul.mubr.f32.gmra.mrb[0].mxu0 %v741
        %v809 = vpop.f32.mrb[0].mxu0
        %v810 = vadd.f32 0.0, %v809
        %v811 = vpop.f32.mrb[0].mxu0
        %812 = vdwg.mxu0
        %v813 = vadd.f32 %v730, %v810
        %s814 = scalar_lea.vmem %s3, 48
        %v815 = vld [vmem:[%s814] sm:$0xff]
        %816 = vrot.lane.b32.xlu0 %v321, 108
        %v817 = vpop.permute.xlu0 %816
        %818 = vrot.lane.b32.xlu0 %v322, 108
        %v819 = vpop.permute.xlu0 %818
        %vm820 = vcmask 883712
        %v821 = vsel %vm820, %v817, %v819
        %v824 = vsel %vm335, %v815, 0
        %826 = vmatprep.subr.mxu0 0.0
        %827 = vmatpush1.msra.mxu0 %v821
        %828 = vmatprep.subr.mxu0 0.0
        %829 = vmatpush1.msra.mxu0 0.0
        %830 = vmatprep.subr.mxu0 0.0
        %831 = vmatpush1.msra.mxu0 0.0
        %832 = vmatprep.subr.mxu0 0.0
        %833 = vmatpush1.msra.mxu0 0.0
        %834 = vmatprep.subr.mxu0 0.0
        %835 = vmatpush1.msra.mxu0 0.0
        %836 = vmatprep.subr.mxu0 0.0
        %837 = vmatpush1.msra.mxu0 0.0
        %838 = vmatprep.subr.mxu0 0.0
        %839 = vmatpush1.msra.mxu0 0.0
        %840 = vmatprep.subr.mxu0 0.0
        %841 = vmatpush1.msra.mxu0 0.0
        %842 = vmatprep.subr.mxu0 0.0
        %843 = vmatpush1.msra.mxu0 0.0
        %844 = vmatprep.subr.mxu0 0.0
        %845 = vmatpush1.msra.mxu0 0.0
        %846 = vmatprep.subr.mxu0 0.0
        %847 = vmatpush1.msra.mxu0 0.0
        %848 = vmatprep.subr.mxu0 0.0
        %849 = vmatpush1.msra.mxu0 0.0
        %850 = vmatprep.subr.mxu0 0.0
        %851 = vmatpush1.msra.mxu0 0.0
        %852 = vmatprep.subr.mxu0 0.0
        %853 = vmatpush1.msra.mxu0 0.0
        %854 = vmatprep.subr.mxu0 0.0
        %855 = vmatpush1.msra.mxu0 0.0
        %856 = vmatprep.subr.mxu0 0.0
        %857 = vmatpush1.msra.mxu0 0.0
        %858 = vmatprep.subr.mxu0 0.0
        %859 = vmatpush1.msra.mxu0 0.0
        %860 = vmatprep.subr.mxu0 0.0
        %861 = vmatpush1.msra.mxu0 0.0
        %862 = vmatprep.subr.mxu0 0.0
        %863 = vmatpush1.msra.mxu0 0.0
        %864 = vmatprep.subr.mxu0 0.0
        %865 = vmatpush1.msra.mxu0 0.0
        %866 = vmatprep.subr.mxu0 0.0
        %867 = vmatpush1.msra.mxu0 0.0
        %868 = vmatprep.subr.mxu0 0.0
        %869 = vmatpush1.msra.mxu0 0.0
        %870 = vmatprep.subr.mxu0 0.0
        %871 = vmatpush1.msra.mxu0 0.0
        %872 = vmatprep.subr.mxu0 0.0
        %873 = vmatpush1.msra.mxu0 0.0
        %874 = vmatprep.subr.mxu0 0.0
        %875 = vmatpush1.msra.mxu0 0.0
        %876 = vmatprep.subr.mxu0 0.0
        %877 = vmatpush1.msra.mxu0 0.0
        %878 = vmatprep.subr.mxu0 0.0
        %879 = vmatpush1.msra.mxu0 0.0
        %880 = vmatprep.subr.mxu0 0.0
        %881 = vmatpush1.msra.mxu0 0.0
        %882 = vmatprep.subr.mxu0 0.0
        %883 = vmatpush1.msra.mxu0 0.0
        %884 = vmatprep.subr.mxu0 0.0
        %885 = vmatpush1.msra.mxu0 0.0
        %886 = vmatprep.subr.mxu0 0.0
        %887 = vmatpush1.msra.mxu0 0.0
        %888 = vmatprep.subr.mxu0 0.0
        %889 = vmatpush1.msra.mxu0 0.0
        %890 = vmatprep.mubr.f32.mxu0 0.0
        %891 = vmatmul.mubr.f32.gmra.mrb[0].mxu0 %v824
        %v892 = vpop.f32.mrb[0].mxu0
        %v893 = vadd.f32 0.0, %v892
        %v894 = vpop.f32.mrb[0].mxu0
        %895 = vdwg.mxu0
        %v896 = vadd.f32 %v813, %v893
        %s897 = scalar_lea.vmem %s3, 56
        %v898 = vld [vmem:[%s897] sm:$0xff]
        %899 = vrot.lane.b32.xlu0 %v321, 107
        %v900 = vpop.permute.xlu0 %899
        %901 = vrot.lane.b32.xlu0 %v322, 107
        %v902 = vpop.permute.xlu0 %901
        %vm903 = vcmask 875520
        %v904 = vsel %vm903, %v900, %v902
        %v907 = vsel %vm335, %v898, 0
        %909 = vmatprep.subr.mxu0 0.0
        %910 = vmatpush1.msra.mxu0 %v904
        %911 = vmatprep.subr.mxu0 0.0
        %912 = vmatpush1.msra.mxu0 0.0
        %913 = vmatprep.subr.mxu0 0.0
        %914 = vmatpush1.msra.mxu0 0.0
        %915 = vmatprep.subr.mxu0 0.0
        %916 = vmatpush1.msra.mxu0 0.0
        %917 = vmatprep.subr.mxu0 0.0
        %918 = vmatpush1.msra.mxu0 0.0
        %919 = vmatprep.subr.mxu0 0.0
        %920 = vmatpush1.msra.mxu0 0.0
        %921 = vmatprep.subr.mxu0 0.0
        %922 = vmatpush1.msra.mxu0 0.0
        %923 = vmatprep.subr.mxu0 0.0
        %924 = vmatpush1.msra.mxu0 0.0
        %925 = vmatprep.subr.mxu0 0.0
        %926 = vmatpush1.msra.mxu0 0.0
        %927 = vmatprep.subr.mxu0 0.0
        %928 = vmatpush1.msra.mxu0 0.0
        %929 = vmatprep.subr.mxu0 0.0
        %930 = vmatpush1.msra.mxu0 0.0
        %931 = vmatprep.subr.mxu0 0.0
        %932 = vmatpush1.msra.mxu0 0.0
        %933 = vmatprep.subr.mxu0 0.0
        %934 = vmatpush1.msra.mxu0 0.0
        %935 = vmatprep.subr.mxu0 0.0
        %936 = vmatpush1.msra.mxu0 0.0
        %937 = vmatprep.subr.mxu0 0.0
        %938 = vmatpush1.msra.mxu0 0.0
        %939 = vmatprep.subr.mxu0 0.0
        %940 = vmatpush1.msra.mxu0 0.0
        %941 = vmatprep.subr.mxu0 0.0
        %942 = vmatpush1.msra.mxu0 0.0
        %943 = vmatprep.subr.mxu0 0.0
        %944 = vmatpush1.msra.mxu0 0.0
        %945 = vmatprep.subr.mxu0 0.0
        %946 = vmatpush1.msra.mxu0 0.0
        %947 = vmatprep.subr.mxu0 0.0
        %948 = vmatpush1.msra.mxu0 0.0
        %949 = vmatprep.subr.mxu0 0.0
        %950 = vmatpush1.msra.mxu0 0.0
        %951 = vmatprep.subr.mxu0 0.0
        %952 = vmatpush1.msra.mxu0 0.0
        %953 = vmatprep.subr.mxu0 0.0
        %954 = vmatpush1.msra.mxu0 0.0
        %955 = vmatprep.subr.mxu0 0.0
        %956 = vmatpush1.msra.mxu0 0.0
        %957 = vmatprep.subr.mxu0 0.0
        %958 = vmatpush1.msra.mxu0 0.0
        %959 = vmatprep.subr.mxu0 0.0
        %960 = vmatpush1.msra.mxu0 0.0
        %961 = vmatprep.subr.mxu0 0.0
        %962 = vmatpush1.msra.mxu0 0.0
        %963 = vmatprep.subr.mxu0 0.0
        %964 = vmatpush1.msra.mxu0 0.0
        %965 = vmatprep.subr.mxu0 0.0
        %966 = vmatpush1.msra.mxu0 0.0
        %967 = vmatprep.subr.mxu0 0.0
        %968 = vmatpush1.msra.mxu0 0.0
        %969 = vmatprep.subr.mxu0 0.0
        %970 = vmatpush1.msra.mxu0 0.0
        %971 = vmatprep.subr.mxu0 0.0
        %972 = vmatpush1.msra.mxu0 0.0
        %973 = vmatprep.mubr.f32.mxu0 0.0
        %974 = vmatmul.mubr.f32.gmra.mrb[0].mxu0 %v907
        %v975 = vpop.f32.mrb[0].mxu0
        %v976 = vadd.f32 0.0, %v975
        %v977 = vpop.f32.mrb[0].mxu0
        %978 = vdwg.mxu0
        %v979 = vadd.f32 %v896, %v976
        %s980 = scalar_lea.vmem %s3, 64
        %v981 = vld [vmem:[%s980] sm:$0xff]
        %982 = vrot.lane.b32.xlu0 %v321, 106
        %v983 = vpop.permute.xlu0 %982
        %984 = vrot.lane.b32.xlu0 %v322, 106
        %v985 = vpop.permute.xlu0 %984
        %vm986 = vcmask 867328
        %v987 = vsel %vm986, %v983, %v985
        %v990 = vsel %vm335, %v981, 0
        %992 = vmatprep.subr.mxu0 0.0
        %993 = vmatpush1.msra.mxu0 %v987
        %994 = vmatprep.subr.mxu0 0.0
        %995 = vmatpush1.msra.mxu0 0.0
        %996 = vmatprep.subr.mxu0 0.0
        %997 = vmatpush1.msra.mxu0 0.0
        %998 = vmatprep.subr.mxu0 0.0
        %999 = vmatpush1.msra.mxu0 0.0
        %1000 = vmatprep.subr.mxu0 0.0
        %1001 = vmatpush1.msra.mxu0 0.0
        %1002 = vmatprep.subr.mxu0 0.0
        %1003 = vmatpush1.msra.mxu0 0.0
        %1004 = vmatprep.subr.mxu0 0.0
        %1005 = vmatpush1.msra.mxu0 0.0
        %1006 = vmatprep.subr.mxu0 0.0
        %1007 = vmatpush1.msra.mxu0 0.0
        %1008 = vmatprep.subr.mxu0 0.0
        %1009 = vmatpush1.msra.mxu0 0.0
        %1010 = vmatprep.subr.mxu0 0.0
        %1011 = vmatpush1.msra.mxu0 0.0
        %1012 = vmatprep.subr.mxu0 0.0
        %1013 = vmatpush1.msra.mxu0 0.0
        %1014 = vmatprep.subr.mxu0 0.0
        %1015 = vmatpush1.msra.mxu0 0.0
        %1016 = vmatprep.subr.mxu0 0.0
        %1017 = vmatpush1.msra.mxu0 0.0
        %1018 = vmatprep.subr.mxu0 0.0
        %1019 = vmatpush1.msra.mxu0 0.0
        %1020 = vmatprep.subr.mxu0 0.0
        %1021 = vmatpush1.msra.mxu0 0.0
        %1022 = vmatprep.subr.mxu0 0.0
        %1023 = vmatpush1.msra.mxu0 0.0
        %1024 = vmatprep.subr.mxu0 0.0
        %1025 = vmatpush1.msra.mxu0 0.0
        %1026 = vmatprep.subr.mxu0 0.0
        %1027 = vmatpush1.msra.mxu0 0.0
        %1028 = vmatprep.subr.mxu0 0.0
        %1029 = vmatpush1.msra.mxu0 0.0
        %1030 = vmatprep.subr.mxu0 0.0
        %1031 = vmatpush1.msra.mxu0 0.0
        %1032 = vmatprep.subr.mxu0 0.0
        %1033 = vmatpush1.msra.mxu0 0.0
        %1034 = vmatprep.subr.mxu0 0.0
        %1035 = vmatpush1.msra.mxu0 0.0
        %1036 = vmatprep.subr.mxu0 0.0
        %1037 = vmatpush1.msra.mxu0 0.0
        %1038 = vmatprep.subr.mxu0 0.0
        %1039 = vmatpush1.msra.mxu0 0.0
        %1040 = vmatprep.subr.mxu0 0.0
        %1041 = vmatpush1.msra.mxu0 0.0
        %1042 = vmatprep.subr.mxu0 0.0
        %1043 = vmatpush1.msra.mxu0 0.0
        %1044 = vmatprep.subr.mxu0 0.0
        %1045 = vmatpush1.msra.mxu0 0.0
        %1046 = vmatprep.subr.mxu0 0.0
        %1047 = vmatpush1.msra.mxu0 0.0
        %1048 = vmatprep.subr.mxu0 0.0
        %1049 = vmatpush1.msra.mxu0 0.0
        %1050 = vmatprep.subr.mxu0 0.0
        %1051 = vmatpush1.msra.mxu0 0.0
        %1052 = vmatprep.subr.mxu0 0.0
        %1053 = vmatpush1.msra.mxu0 0.0
        %1054 = vmatprep.subr.mxu0 0.0
        %1055 = vmatpush1.msra.mxu0 0.0
        %1056 = vmatprep.mubr.f32.mxu0 0.0
        %1057 = vmatmul.mubr.f32.gmra.mrb[0].mxu0 %v990
        %v1058 = vpop.f32.mrb[0].mxu0
        %v1059 = vadd.f32 0.0, %v1058
        %v1060 = vpop.f32.mrb[0].mxu0
        %1061 = vdwg.mxu0
        %v1062 = vadd.f32 %v979, %v1059
        %v1063 = vld [vmem:[%s275] sm:$0xff]
        %v1064 = vld [vmem:[%s275 + $0x8] sm:$0xff]
        %s1065 = scalar_lea.vmem %s3, 72
        %v1066 = vld [vmem:[%s1065] sm:$0xff]
        %v1068 = vsel %vm335, %v1066, 0
        %1070 = vmatprep.subr.mxu0 0.0
        %1071 = vmatpush1.msra.mxu0 %v1063
        %1072 = vmatprep.subr.mxu0 0.0
        %1073 = vmatpush1.msra.mxu0 0.0
        %1074 = vmatprep.subr.mxu0 0.0
        %1075 = vmatpush1.msra.mxu0 0.0
        %1076 = vmatprep.subr.mxu0 0.0
        %1077 = vmatpush1.msra.mxu0 0.0
        %1078 = vmatprep.subr.mxu0 0.0
        %1079 = vmatpush1.msra.mxu0 0.0
        %1080 = vmatprep.subr.mxu0 0.0
        %1081 = vmatpush1.msra.mxu0 0.0
        %1082 = vmatprep.subr.mxu0 0.0
        %1083 = vmatpush1.msra.mxu0 0.0
        %1084 = vmatprep.subr.mxu0 0.0
        %1085 = vmatpush1.msra.mxu0 0.0
        %1086 = vmatprep.subr.mxu0 0.0
        %1087 = vmatpush1.msra.mxu0 0.0
        %1088 = vmatprep.subr.mxu0 0.0
        %1089 = vmatpush1.msra.mxu0 0.0
        %1090 = vmatprep.subr.mxu0 0.0
        %1091 = vmatpush1.msra.mxu0 0.0
        %1092 = vmatprep.subr.mxu0 0.0
        %1093 = vmatpush1.msra.mxu0 0.0
        %1094 = vmatprep.subr.mxu0 0.0
        %1095 = vmatpush1.msra.mxu0 0.0
        %1096 = vmatprep.subr.mxu0 0.0
        %1097 = vmatpush1.msra.mxu0 0.0
        %1098 = vmatprep.subr.mxu0 0.0
        %1099 = vmatpush1.msra.mxu0 0.0
        %1100 = vmatprep.subr.mxu0 0.0
        %1101 = vmatpush1.msra.mxu0 0.0
        %1102 = vmatprep.subr.mxu0 0.0
        %1103 = vmatpush1.msra.mxu0 0.0
        %1104 = vmatprep.subr.mxu0 0.0
        %1105 = vmatpush1.msra.mxu0 0.0
        %1106 = vmatprep.subr.mxu0 0.0
        %1107 = vmatpush1.msra.mxu0 0.0
        %1108 = vmatprep.subr.mxu0 0.0
        %1109 = vmatpush1.msra.mxu0 0.0
        %1110 = vmatprep.subr.mxu0 0.0
        %1111 = vmatpush1.msra.mxu0 0.0
        %1112 = vmatprep.subr.mxu0 0.0
        %1113 = vmatpush1.msra.mxu0 0.0
        %1114 = vmatprep.subr.mxu0 0.0
        %1115 = vmatpush1.msra.mxu0 0.0
        %1116 = vmatprep.subr.mxu0 0.0
        %1117 = vmatpush1.msra.mxu0 0.0
        %1118 = vmatprep.subr.mxu0 0.0
        %1119 = vmatpush1.msra.mxu0 0.0
        %1120 = vmatprep.subr.mxu0 0.0
        %1121 = vmatpush1.msra.mxu0 0.0
        %1122 = vmatprep.subr.mxu0 0.0
        %1123 = vmatpush1.msra.mxu0 0.0
        %1124 = vmatprep.subr.mxu0 0.0
        %1125 = vmatpush1.msra.mxu0 0.0
        %1126 = vmatprep.subr.mxu0 0.0
        %1127 = vmatpush1.msra.mxu0 0.0
        %1128 = vmatprep.subr.mxu0 0.0
        %1129 = vmatpush1.msra.mxu0 0.0
        %1130 = vmatprep.subr.mxu0 0.0
        %1131 = vmatpush1.msra.mxu0 0.0
        %1132 = vmatprep.subr.mxu0 0.0
        %1133 = vmatpush1.msra.mxu0 0.0
        %1134 = vmatprep.mubr.f32.mxu0 0.0
        %1135 = vmatmul.mubr.f32.gmra.mrb[0].mxu0 %v1068
        %v1136 = vpop.f32.mrb[0].mxu0
        %v1137 = vadd.f32 0.0, %v1136
        %v1138 = vpop.f32.mrb[0].mxu0
        %1139 = vdwg.mxu0
        %v1140 = vadd.f32 %v1062, %v1137
        %s1141 = scalar_lea.vmem %s3, 80
        %v1142 = vld [vmem:[%s1141] sm:$0xff]
        %1145 = vrot.lane.b32.xlu0 %v1063, 127
        %v1146 = vpop.permute.xlu0 %1145
        %1147 = vrot.lane.b32.xlu0 %v1064, 127
        %v1148 = vpop.permute.xlu0 %1147
        %v1149 = vsel %vm332, %v1146, %v1148
        %v1152 = vsel %vm335, %v1142, 0
        %1154 = vmatprep.subr.mxu0 0.0
        %1155 = vmatpush1.msra.mxu0 %v1149
        %1156 = vmatprep.subr.mxu0 0.0
        %1157 = vmatpush1.msra.mxu0 0.0
        %1158 = vmatprep.subr.mxu0 0.0
        %1159 = vmatpush1.msra.mxu0 0.0
        %1160 = vmatprep.subr.mxu0 0.0
        %1161 = vmatpush1.msra.mxu0 0.0
        %1162 = vmatprep.subr.mxu0 0.0
        %1163 = vmatpush1.msra.mxu0 0.0
        %1164 = vmatprep.subr.mxu0 0.0
        %1165 = vmatpush1.msra.mxu0 0.0
        %1166 = vmatprep.subr.mxu0 0.0
        %1167 = vmatpush1.msra.mxu0 0.0
        %1168 = vmatprep.subr.mxu0 0.0
        %1169 = vmatpush1.msra.mxu0 0.0
        %1170 = vmatprep.subr.mxu0 0.0
        %1171 = vmatpush1.msra.mxu0 0.0
        %1172 = vmatprep.subr.mxu0 0.0
        %1173 = vmatpush1.msra.mxu0 0.0
        %1174 = vmatprep.subr.mxu0 0.0
        %1175 = vmatpush1.msra.mxu0 0.0
        %1176 = vmatprep.subr.mxu0 0.0
        %1177 = vmatpush1.msra.mxu0 0.0
        %1178 = vmatprep.subr.mxu0 0.0
        %1179 = vmatpush1.msra.mxu0 0.0
        %1180 = vmatprep.subr.mxu0 0.0
        %1181 = vmatpush1.msra.mxu0 0.0
        %1182 = vmatprep.subr.mxu0 0.0
        %1183 = vmatpush1.msra.mxu0 0.0
        %1184 = vmatprep.subr.mxu0 0.0
        %1185 = vmatpush1.msra.mxu0 0.0
        %1186 = vmatprep.subr.mxu0 0.0
        %1187 = vmatpush1.msra.mxu0 0.0
        %1188 = vmatprep.subr.mxu0 0.0
        %1189 = vmatpush1.msra.mxu0 0.0
        %1190 = vmatprep.subr.mxu0 0.0
        %1191 = vmatpush1.msra.mxu0 0.0
        %1192 = vmatprep.subr.mxu0 0.0
        %1193 = vmatpush1.msra.mxu0 0.0
        %1194 = vmatprep.subr.mxu0 0.0
        %1195 = vmatpush1.msra.mxu0 0.0
        %1196 = vmatprep.subr.mxu0 0.0
        %1197 = vmatpush1.msra.mxu0 0.0
        %1198 = vmatprep.subr.mxu0 0.0
        %1199 = vmatpush1.msra.mxu0 0.0
        %1200 = vmatprep.subr.mxu0 0.0
        %1201 = vmatpush1.msra.mxu0 0.0
        %1202 = vmatprep.subr.mxu0 0.0
        %1203 = vmatpush1.msra.mxu0 0.0
        %1204 = vmatprep.subr.mxu0 0.0
        %1205 = vmatpush1.msra.mxu0 0.0
        %1206 = vmatprep.subr.mxu0 0.0
        %1207 = vmatpush1.msra.mxu0 0.0
        %1208 = vmatprep.subr.mxu0 0.0
        %1209 = vmatpush1.msra.mxu0 0.0
        %1210 = vmatprep.subr.mxu0 0.0
        %1211 = vmatpush1.msra.mxu0 0.0
        %1212 = vmatprep.subr.mxu0 0.0
        %1213 = vmatpush1.msra.mxu0 0.0
        %1214 = vmatprep.subr.mxu0 0.0
        %1215 = vmatpush1.msra.mxu0 0.0
        %1216 = vmatprep.subr.mxu0 0.0
        %1217 = vmatpush1.msra.mxu0 0.0
        %1218 = vmatprep.mubr.f32.mxu0 0.0
        %1219 = vmatmul.mubr.f32.gmra.mrb[0].mxu0 %v1152
        %v1220 = vpop.f32.mrb[0].mxu0
        %v1221 = vadd.f32 0.0, %v1220
        %v1222 = vpop.f32.mrb[0].mxu0
        %1223 = vdwg.mxu0
        %v1224 = vadd.f32 %v1140, %v1221
        %s1225 = scalar_lea.vmem %s3, 88
        %v1226 = vld [vmem:[%s1225] sm:$0xff]
        %1227 = vrot.lane.b32.xlu0 %v1063, 126
        %v1228 = vpop.permute.xlu0 %1227
        %1229 = vrot.lane.b32.xlu0 %v1064, 126
        %v1230 = vpop.permute.xlu0 %1229
        %v1231 = vsel %vm488, %v1228, %v1230
        %v1234 = vsel %vm335, %v1226, 0
        %1236 = vmatprep.subr.mxu0 0.0
        %1237 = vmatpush1.msra.mxu0 %v1231
        %1238 = vmatprep.subr.mxu0 0.0
        %1239 = vmatpush1.msra.mxu0 0.0
        %1240 = vmatprep.subr.mxu0 0.0
        %1241 = vmatpush1.msra.mxu0 0.0
        %1242 = vmatprep.subr.mxu0 0.0
        %1243 = vmatpush1.msra.mxu0 0.0
        %1244 = vmatprep.subr.mxu0 0.0
        %1245 = vmatpush1.msra.mxu0 0.0
        %1246 = vmatprep.subr.mxu0 0.0
        %1247 = vmatpush1.msra.mxu0 0.0
        %1248 = vmatprep.subr.mxu0 0.0
        %1249 = vmatpush1.msra.mxu0 0.0
        %1250 = vmatprep.subr.mxu0 0.0
        %1251 = vmatpush1.msra.mxu0 0.0
        %1252 = vmatprep.subr.mxu0 0.0
        %1253 = vmatpush1.msra.mxu0 0.0
        %1254 = vmatprep.subr.mxu0 0.0
        %1255 = vmatpush1.msra.mxu0 0.0
        %1256 = vmatprep.subr.mxu0 0.0
        %1257 = vmatpush1.msra.mxu0 0.0
        %1258 = vmatprep.subr.mxu0 0.0
        %1259 = vmatpush1.msra.mxu0 0.0
        %1260 = vmatprep.subr.mxu0 0.0
        %1261 = vmatpush1.msra.mxu0 0.0
        %1262 = vmatprep.subr.mxu0 0.0
        %1263 = vmatpush1.msra.mxu0 0.0
        %1264 = vmatprep.subr.mxu0 0.0
        %1265 = vmatpush1.msra.mxu0 0.0
        %1266 = vmatprep.subr.mxu0 0.0
        %1267 = vmatpush1.msra.mxu0 0.0
        %1268 = vmatprep.subr.mxu0 0.0
        %1269 = vmatpush1.msra.mxu0 0.0
        %1270 = vmatprep.subr.mxu0 0.0
        %1271 = vmatpush1.msra.mxu0 0.0
        %1272 = vmatprep.subr.mxu0 0.0
        %1273 = vmatpush1.msra.mxu0 0.0
        %1274 = vmatprep.subr.mxu0 0.0
        %1275 = vmatpush1.msra.mxu0 0.0
        %1276 = vmatprep.subr.mxu0 0.0
        %1277 = vmatpush1.msra.mxu0 0.0
        %1278 = vmatprep.subr.mxu0 0.0
        %1279 = vmatpush1.msra.mxu0 0.0
        %1280 = vmatprep.subr.mxu0 0.0
        %1281 = vmatpush1.msra.mxu0 0.0
        %1282 = vmatprep.subr.mxu0 0.0
        %1283 = vmatpush1.msra.mxu0 0.0
        %1284 = vmatprep.subr.mxu0 0.0
        %1285 = vmatpush1.msra.mxu0 0.0
        %1286 = vmatprep.subr.mxu0 0.0
        %1287 = vmatpush1.msra.mxu0 0.0
        %1288 = vmatprep.subr.mxu0 0.0
        %1289 = vmatpush1.msra.mxu0 0.0
        %1290 = vmatprep.subr.mxu0 0.0
        %1291 = vmatpush1.msra.mxu0 0.0
        %1292 = vmatprep.subr.mxu0 0.0
        %1293 = vmatpush1.msra.mxu0 0.0
        %1294 = vmatprep.subr.mxu0 0.0
        %1295 = vmatpush1.msra.mxu0 0.0
        %1296 = vmatprep.subr.mxu0 0.0
        %1297 = vmatpush1.msra.mxu0 0.0
        %1298 = vmatprep.subr.mxu0 0.0
        %1299 = vmatpush1.msra.mxu0 0.0
        %1300 = vmatprep.mubr.f32.mxu0 0.0
        %1301 = vmatmul.mubr.f32.gmra.mrb[0].mxu0 %v1234
        %v1302 = vpop.f32.mrb[0].mxu0
        %v1303 = vadd.f32 0.0, %v1302
        %v1304 = vpop.f32.mrb[0].mxu0
        %1305 = vdwg.mxu0
        %v1306 = vadd.f32 %v1224, %v1303
        %s1307 = scalar_lea.vmem %s3, 96
        %v1308 = vld [vmem:[%s1307] sm:$0xff]
        %1309 = vrot.lane.b32.xlu0 %v1063, 118
        %v1310 = vpop.permute.xlu0 %1309
        %1311 = vrot.lane.b32.xlu0 %v1064, 118
        %v1312 = vpop.permute.xlu0 %1311
        %v1313 = vsel %vm571, %v1310, %v1312
        %v1316 = vsel %vm335, %v1308, 0
        %1318 = vmatprep.subr.mxu0 0.0
        %1319 = vmatpush1.msra.mxu0 %v1313
        %1320 = vmatprep.subr.mxu0 0.0
        %1321 = vmatpush1.msra.mxu0 0.0
        %1322 = vmatprep.subr.mxu0 0.0
        %1323 = vmatpush1.msra.mxu0 0.0
        %1324 = vmatprep.subr.mxu0 0.0
        %1325 = vmatpush1.msra.mxu0 0.0
        %1326 = vmatprep.subr.mxu0 0.0
        %1327 = vmatpush1.msra.mxu0 0.0
        %1328 = vmatprep.subr.mxu0 0.0
        %1329 = vmatpush1.msra.mxu0 0.0
        %1330 = vmatprep.subr.mxu0 0.0
        %1331 = vmatpush1.msra.mxu0 0.0
        %1332 = vmatprep.subr.mxu0 0.0
        %1333 = vmatpush1.msra.mxu0 0.0
        %1334 = vmatprep.subr.mxu0 0.0
        %1335 = vmatpush1.msra.mxu0 0.0
        %1336 = vmatprep.subr.mxu0 0.0
        %1337 = vmatpush1.msra.mxu0 0.0
        %1338 = vmatprep.subr.mxu0 0.0
        %1339 = vmatpush1.msra.mxu0 0.0
        %1340 = vmatprep.subr.mxu0 0.0
        %1341 = vmatpush1.msra.mxu0 0.0
        %1342 = vmatprep.subr.mxu0 0.0
        %1343 = vmatpush1.msra.mxu0 0.0
        %1344 = vmatprep.subr.mxu0 0.0
        %1345 = vmatpush1.msra.mxu0 0.0
        %1346 = vmatprep.subr.mxu0 0.0
        %1347 = vmatpush1.msra.mxu0 0.0
        %1348 = vmatprep.subr.mxu0 0.0
        %1349 = vmatpush1.msra.mxu0 0.0
        %1350 = vmatprep.subr.mxu0 0.0
        %1351 = vmatpush1.msra.mxu0 0.0
        %1352 = vmatprep.subr.mxu0 0.0
        %1353 = vmatpush1.msra.mxu0 0.0
        %1354 = vmatprep.subr.mxu0 0.0
        %1355 = vmatpush1.msra.mxu0 0.0
        %1356 = vmatprep.subr.mxu0 0.0
        %1357 = vmatpush1.msra.mxu0 0.0
        %1358 = vmatprep.subr.mxu0 0.0
        %1359 = vmatpush1.msra.mxu0 0.0
        %1360 = vmatprep.subr.mxu0 0.0
        %1361 = vmatpush1.msra.mxu0 0.0
        %1362 = vmatprep.subr.mxu0 0.0
        %1363 = vmatpush1.msra.mxu0 0.0
        %1364 = vmatprep.subr.mxu0 0.0
        %1365 = vmatpush1.msra.mxu0 0.0
        %1366 = vmatprep.subr.mxu0 0.0
        %1367 = vmatpush1.msra.mxu0 0.0
        %1368 = vmatprep.subr.mxu0 0.0
        %1369 = vmatpush1.msra.mxu0 0.0
        %1370 = vmatprep.subr.mxu0 0.0
        %1371 = vmatpush1.msra.mxu0 0.0
        %1372 = vmatprep.subr.mxu0 0.0
        %1373 = vmatpush1.msra.mxu0 0.0
        %1374 = vmatprep.subr.mxu0 0.0
        %1375 = vmatpush1.msra.mxu0 0.0
        %1376 = vmatprep.subr.mxu0 0.0
        %1377 = vmatpush1.msra.mxu0 0.0
        %1378 = vmatprep.subr.mxu0 0.0
        %1379 = vmatpush1.msra.mxu0 0.0
        %1380 = vmatprep.subr.mxu0 0.0
        %1381 = vmatpush1.msra.mxu0 0.0
        %1382 = vmatprep.mubr.f32.mxu0 0.0
        %1383 = vmatmul.mubr.f32.gmra.mrb[0].mxu0 %v1316
        %v1384 = vpop.f32.mrb[0].mxu0
        %v1385 = vadd.f32 0.0, %v1384
        %v1386 = vpop.f32.mrb[0].mxu0
        %1387 = vdwg.mxu0
        %v1388 = vadd.f32 %v1306, %v1385
        %s1389 = scalar_lea.vmem %s3, 104
        %v1390 = vld [vmem:[%s1389] sm:$0xff]
        %1391 = vrot.lane.b32.xlu0 %v1063, 117
        %v1392 = vpop.permute.xlu0 %1391
        %1393 = vrot.lane.b32.xlu0 %v1064, 117
        %v1394 = vpop.permute.xlu0 %1393
        %v1395 = vsel %vm654, %v1392, %v1394
        %v1398 = vsel %vm335, %v1390, 0
        %1400 = vmatprep.subr.mxu0 0.0
        %1401 = vmatpush1.msra.mxu0 %v1395
        %1402 = vmatprep.subr.mxu0 0.0
        %1403 = vmatpush1.msra.mxu0 0.0
        %1404 = vmatprep.subr.mxu0 0.0
        %1405 = vmatpush1.msra.mxu0 0.0
        %1406 = vmatprep.subr.mxu0 0.0
        %1407 = vmatpush1.msra.mxu0 0.0
        %1408 = vmatprep.subr.mxu0 0.0
        %1409 = vmatpush1.msra.mxu0 0.0
        %1410 = vmatprep.subr.mxu0 0.0
        %1411 = vmatpush1.msra.mxu0 0.0
        %1412 = vmatprep.subr.mxu0 0.0
        %1413 = vmatpush1.msra.mxu0 0.0
        %1414 = vmatprep.subr.mxu0 0.0
        %1415 = vmatpush1.msra.mxu0 0.0
        %1416 = vmatprep.subr.mxu0 0.0
        %1417 = vmatpush1.msra.mxu0 0.0
        %1418 = vmatprep.subr.mxu0 0.0
        %1419 = vmatpush1.msra.mxu0 0.0
        %1420 = vmatprep.subr.mxu0 0.0
        %1421 = vmatpush1.msra.mxu0 0.0
        %1422 = vmatprep.subr.mxu0 0.0
        %1423 = vmatpush1.msra.mxu0 0.0
        %1424 = vmatprep.subr.mxu0 0.0
        %1425 = vmatpush1.msra.mxu0 0.0
        %1426 = vmatprep.subr.mxu0 0.0
        %1427 = vmatpush1.msra.mxu0 0.0
        %1428 = vmatprep.subr.mxu0 0.0
        %1429 = vmatpush1.msra.mxu0 0.0
        %1430 = vmatprep.subr.mxu0 0.0
        %1431 = vmatpush1.msra.mxu0 0.0
        %1432 = vmatprep.subr.mxu0 0.0
        %1433 = vmatpush1.msra.mxu0 0.0
        %1434 = vmatprep.subr.mxu0 0.0
        %1435 = vmatpush1.msra.mxu0 0.0
        %1436 = vmatprep.subr.mxu0 0.0
        %1437 = vmatpush1.msra.mxu0 0.0
        %1438 = vmatprep.subr.mxu0 0.0
        %1439 = vmatpush1.msra.mxu0 0.0
        %1440 = vmatprep.subr.mxu0 0.0
        %1441 = vmatpush1.msra.mxu0 0.0
        %1442 = vmatprep.subr.mxu0 0.0
        %1443 = vmatpush1.msra.mxu0 0.0
        %1444 = vmatprep.subr.mxu0 0.0
        %1445 = vmatpush1.msra.mxu0 0.0
        %1446 = vmatprep.subr.mxu0 0.0
        %1447 = vmatpush1.msra.mxu0 0.0
        %1448 = vmatprep.subr.mxu0 0.0
        %1449 = vmatpush1.msra.mxu0 0.0
        %1450 = vmatprep.subr.mxu0 0.0
        %1451 = vmatpush1.msra.mxu0 0.0
        %1452 = vmatprep.subr.mxu0 0.0
        %1453 = vmatpush1.msra.mxu0 0.0
        %1454 = vmatprep.subr.mxu0 0.0
        %1455 = vmatpush1.msra.mxu0 0.0
        %1456 = vmatprep.subr.mxu0 0.0
        %1457 = vmatpush1.msra.mxu0 0.0
        %1458 = vmatprep.subr.mxu0 0.0
        %1459 = vmatpush1.msra.mxu0 0.0
        %1460 = vmatprep.subr.mxu0 0.0
        %1461 = vmatpush1.msra.mxu0 0.0
        %1462 = vmatprep.subr.mxu0 0.0
        %1463 = vmatpush1.msra.mxu0 0.0
        %1464 = vmatprep.mubr.f32.mxu0 0.0
        %1465 = vmatmul.mubr.f32.gmra.mrb[0].mxu0 %v1398
        %v1466 = vpop.f32.mrb[0].mxu0
        %v1467 = vadd.f32 0.0, %v1466
        %v1468 = vpop.f32.mrb[0].mxu0
        %1469 = vdwg.mxu0
        %v1470 = vadd.f32 %v1388, %v1467
        %s1471 = scalar_lea.vmem %s3, 112
        %v1472 = vld [vmem:[%s1471] sm:$0xff]
        %1473 = vrot.lane.b32.xlu0 %v1063, 116
        %v1474 = vpop.permute.xlu0 %1473
        %1475 = vrot.lane.b32.xlu0 %v1064, 116
        %v1476 = vpop.permute.xlu0 %1475
        %v1477 = vsel %vm737, %v1474, %v1476
        %v1480 = vsel %vm335, %v1472, 0
        %1482 = vmatprep.subr.mxu0 0.0
        %1483 = vmatpush1.msra.mxu0 %v1477
        %1484 = vmatprep.subr.mxu0 0.0
        %1485 = vmatpush1.msra.mxu0 0.0
        %1486 = vmatprep.subr.mxu0 0.0
        %1487 = vmatpush1.msra.mxu0 0.0
        %1488 = vmatprep.subr.mxu0 0.0
        %1489 = vmatpush1.msra.mxu0 0.0
        %1490 = vmatprep.subr.mxu0 0.0
        %1491 = vmatpush1.msra.mxu0 0.0
        %1492 = vmatprep.subr.mxu0 0.0
        %1493 = vmatpush1.msra.mxu0 0.0
        %1494 = vmatprep.subr.mxu0 0.0
        %1495 = vmatpush1.msra.mxu0 0.0
        %1496 = vmatprep.subr.mxu0 0.0
        %1497 = vmatpush1.msra.mxu0 0.0
        %1498 = vmatprep.subr.mxu0 0.0
        %1499 = vmatpush1.msra.mxu0 0.0
        %1500 = vmatprep.subr.mxu0 0.0
        %1501 = vmatpush1.msra.mxu0 0.0
        %1502 = vmatprep.subr.mxu0 0.0
        %1503 = vmatpush1.msra.mxu0 0.0
        %1504 = vmatprep.subr.mxu0 0.0
        %1505 = vmatpush1.msra.mxu0 0.0
        %1506 = vmatprep.subr.mxu0 0.0
        %1507 = vmatpush1.msra.mxu0 0.0
        %1508 = vmatprep.subr.mxu0 0.0
        %1509 = vmatpush1.msra.mxu0 0.0
        %1510 = vmatprep.subr.mxu0 0.0
        %1511 = vmatpush1.msra.mxu0 0.0
        %1512 = vmatprep.subr.mxu0 0.0
        %1513 = vmatpush1.msra.mxu0 0.0
        %1514 = vmatprep.subr.mxu0 0.0
        %1515 = vmatpush1.msra.mxu0 0.0
        %1516 = vmatprep.subr.mxu0 0.0
        %1517 = vmatpush1.msra.mxu0 0.0
        %1518 = vmatprep.subr.mxu0 0.0
        %1519 = vmatpush1.msra.mxu0 0.0
        %1520 = vmatprep.subr.mxu0 0.0
        %1521 = vmatpush1.msra.mxu0 0.0
        %1522 = vmatprep.subr.mxu0 0.0
        %1523 = vmatpush1.msra.mxu0 0.0
        %1524 = vmatprep.subr.mxu0 0.0
        %1525 = vmatpush1.msra.mxu0 0.0
        %1526 = vmatprep.subr.mxu0 0.0
        %1527 = vmatpush1.msra.mxu0 0.0
        %1528 = vmatprep.subr.mxu0 0.0
        %1529 = vmatpush1.msra.mxu0 0.0
        %1530 = vmatprep.subr.mxu0 0.0
        %1531 = vmatpush1.msra.mxu0 0.0
        %1532 = vmatprep.subr.mxu0 0.0
        %1533 = vmatpush1.msra.mxu0 0.0
        %1534 = vmatprep.subr.mxu0 0.0
        %1535 = vmatpush1.msra.mxu0 0.0
        %1536 = vmatprep.subr.mxu0 0.0
        %1537 = vmatpush1.msra.mxu0 0.0
        %1538 = vmatprep.subr.mxu0 0.0
        %1539 = vmatpush1.msra.mxu0 0.0
        %1540 = vmatprep.subr.mxu0 0.0
        %1541 = vmatpush1.msra.mxu0 0.0
        %1542 = vmatprep.subr.mxu0 0.0
        %1543 = vmatpush1.msra.mxu0 0.0
        %1544 = vmatprep.subr.mxu0 0.0
        %1545 = vmatpush1.msra.mxu0 0.0
        %1546 = vmatprep.mubr.f32.mxu0 0.0
        %1547 = vmatmul.mubr.f32.gmra.mrb[0].mxu0 %v1480
        %v1548 = vpop.f32.mrb[0].mxu0
        %v1549 = vadd.f32 0.0, %v1548
        %v1550 = vpop.f32.mrb[0].mxu0
        %1551 = vdwg.mxu0
        %v1552 = vadd.f32 %v1470, %v1549
        %s1553 = scalar_lea.vmem %s3, 120
        %v1554 = vld [vmem:[%s1553] sm:$0xff]
        %1555 = vrot.lane.b32.xlu0 %v1063, 108
        %v1556 = vpop.permute.xlu0 %1555
        %1557 = vrot.lane.b32.xlu0 %v1064, 108
        %v1558 = vpop.permute.xlu0 %1557
        %v1559 = vsel %vm820, %v1556, %v1558
        %v1562 = vsel %vm335, %v1554, 0
        %1564 = vmatprep.subr.mxu0 0.0
        %1565 = vmatpush1.msra.mxu0 %v1559
        %1566 = vmatprep.subr.mxu0 0.0
        %1567 = vmatpush1.msra.mxu0 0.0
        %1568 = vmatprep.subr.mxu0 0.0
        %1569 = vmatpush1.msra.mxu0 0.0
        %1570 = vmatprep.subr.mxu0 0.0
        %1571 = vmatpush1.msra.mxu0 0.0
        %1572 = vmatprep.subr.mxu0 0.0
        %1573 = vmatpush1.msra.mxu0 0.0
        %1574 = vmatprep.subr.mxu0 0.0
        %1575 = vmatpush1.msra.mxu0 0.0
        %1576 = vmatprep.subr.mxu0 0.0
        %1577 = vmatpush1.msra.mxu0 0.0
        %1578 = vmatprep.subr.mxu0 0.0
        %1579 = vmatpush1.msra.mxu0 0.0
        %1580 = vmatprep.subr.mxu0 0.0
        %1581 = vmatpush1.msra.mxu0 0.0
        %1582 = vmatprep.subr.mxu0 0.0
        %1583 = vmatpush1.msra.mxu0 0.0
        %1584 = vmatprep.subr.mxu0 0.0
        %1585 = vmatpush1.msra.mxu0 0.0
        %1586 = vmatprep.subr.mxu0 0.0
        %1587 = vmatpush1.msra.mxu0 0.0
        %1588 = vmatprep.subr.mxu0 0.0
        %1589 = vmatpush1.msra.mxu0 0.0
        %1590 = vmatprep.subr.mxu0 0.0
        %1591 = vmatpush1.msra.mxu0 0.0
        %1592 = vmatprep.subr.mxu0 0.0
        %1593 = vmatpush1.msra.mxu0 0.0
        %1594 = vmatprep.subr.mxu0 0.0
        %1595 = vmatpush1.msra.mxu0 0.0
        %1596 = vmatprep.subr.mxu0 0.0
        %1597 = vmatpush1.msra.mxu0 0.0
        %1598 = vmatprep.subr.mxu0 0.0
        %1599 = vmatpush1.msra.mxu0 0.0
        %1600 = vmatprep.subr.mxu0 0.0
        %1601 = vmatpush1.msra.mxu0 0.0
        %1602 = vmatprep.subr.mxu0 0.0
        %1603 = vmatpush1.msra.mxu0 0.0
        %1604 = vmatprep.subr.mxu0 0.0
        %1605 = vmatpush1.msra.mxu0 0.0
        %1606 = vmatprep.subr.mxu0 0.0
        %1607 = vmatpush1.msra.mxu0 0.0
        %1608 = vmatprep.subr.mxu0 0.0
        %1609 = vmatpush1.msra.mxu0 0.0
        %1610 = vmatprep.subr.mxu0 0.0
        %1611 = vmatpush1.msra.mxu0 0.0
        %1612 = vmatprep.subr.mxu0 0.0
        %1613 = vmatpush1.msra.mxu0 0.0
        %1614 = vmatprep.subr.mxu0 0.0
        %1615 = vmatpush1.msra.mxu0 0.0
        %1616 = vmatprep.subr.mxu0 0.0
        %1617 = vmatpush1.msra.mxu0 0.0
        %1618 = vmatprep.subr.mxu0 0.0
        %1619 = vmatpush1.msra.mxu0 0.0
        %1620 = vmatprep.subr.mxu0 0.0
        %1621 = vmatpush1.msra.mxu0 0.0
        %1622 = vmatprep.subr.mxu0 0.0
        %1623 = vmatpush1.msra.mxu0 0.0
        %1624 = vmatprep.subr.mxu0 0.0
        %1625 = vmatpush1.msra.mxu0 0.0
        %1626 = vmatprep.subr.mxu0 0.0
        %1627 = vmatpush1.msra.mxu0 0.0
        %1628 = vmatprep.mubr.f32.mxu0 0.0
        %1629 = vmatmul.mubr.f32.gmra.mrb[0].mxu0 %v1562
        %v1630 = vpop.f32.mrb[0].mxu0
        %v1631 = vadd.f32 0.0, %v1630
        %v1632 = vpop.f32.mrb[0].mxu0
        %1633 = vdwg.mxu0
        %v1634 = vadd.f32 %v1552, %v1631
        %s1635 = scalar_lea.vmem %s3, 128
        %v1636 = vld [vmem:[%s1635] sm:$0xff]
        %1637 = vrot.lane.b32.xlu0 %v1063, 107
        %v1638 = vpop.permute.xlu0 %1637
        %1639 = vrot.lane.b32.xlu0 %v1064, 107
        %v1640 = vpop.permute.xlu0 %1639
        %v1641 = vsel %vm903, %v1638, %v1640
        %v1644 = vsel %vm335, %v1636, 0
        %1646 = vmatprep.subr.mxu0 0.0
        %1647 = vmatpush1.msra.mxu0 %v1641
        %1648 = vmatprep.subr.mxu0 0.0
        %1649 = vmatpush1.msra.mxu0 0.0
        %1650 = vmatprep.subr.mxu0 0.0
        %1651 = vmatpush1.msra.mxu0 0.0
        %1652 = vmatprep.subr.mxu0 0.0
        %1653 = vmatpush1.msra.mxu0 0.0
        %1654 = vmatprep.subr.mxu0 0.0
        %1655 = vmatpush1.msra.mxu0 0.0
        %1656 = vmatprep.subr.mxu0 0.0
        %1657 = vmatpush1.msra.mxu0 0.0
        %1658 = vmatprep.subr.mxu0 0.0
        %1659 = vmatpush1.msra.mxu0 0.0
        %1660 = vmatprep.subr.mxu0 0.0
        %1661 = vmatpush1.msra.mxu0 0.0
        %1662 = vmatprep.subr.mxu0 0.0
        %1663 = vmatpush1.msra.mxu0 0.0
        %1664 = vmatprep.subr.mxu0 0.0
        %1665 = vmatpush1.msra.mxu0 0.0
        %1666 = vmatprep.subr.mxu0 0.0
        %1667 = vmatpush1.msra.mxu0 0.0
        %1668 = vmatprep.subr.mxu0 0.0
        %1669 = vmatpush1.msra.mxu0 0.0
        %1670 = vmatprep.subr.mxu0 0.0
        %1671 = vmatpush1.msra.mxu0 0.0
        %1672 = vmatprep.subr.mxu0 0.0
        %1673 = vmatpush1.msra.mxu0 0.0
        %1674 = vmatprep.subr.mxu0 0.0
        %1675 = vmatpush1.msra.mxu0 0.0
        %1676 = vmatprep.subr.mxu0 0.0
        %1677 = vmatpush1.msra.mxu0 0.0
        %1678 = vmatprep.subr.mxu0 0.0
        %1679 = vmatpush1.msra.mxu0 0.0
        %1680 = vmatprep.subr.mxu0 0.0
        %1681 = vmatpush1.msra.mxu0 0.0
        %1682 = vmatprep.subr.mxu0 0.0
        %1683 = vmatpush1.msra.mxu0 0.0
        %1684 = vmatprep.subr.mxu0 0.0
        %1685 = vmatpush1.msra.mxu0 0.0
        %1686 = vmatprep.subr.mxu0 0.0
        %1687 = vmatpush1.msra.mxu0 0.0
        %1688 = vmatprep.subr.mxu0 0.0
        %1689 = vmatpush1.msra.mxu0 0.0
        %1690 = vmatprep.subr.mxu0 0.0
        %1691 = vmatpush1.msra.mxu0 0.0
        %1692 = vmatprep.subr.mxu0 0.0
        %1693 = vmatpush1.msra.mxu0 0.0
        %1694 = vmatprep.subr.mxu0 0.0
        %1695 = vmatpush1.msra.mxu0 0.0
        %1696 = vmatprep.subr.mxu0 0.0
        %1697 = vmatpush1.msra.mxu0 0.0
        %1698 = vmatprep.subr.mxu0 0.0
        %1699 = vmatpush1.msra.mxu0 0.0
        %1700 = vmatprep.subr.mxu0 0.0
        %1701 = vmatpush1.msra.mxu0 0.0
        %1702 = vmatprep.subr.mxu0 0.0
        %1703 = vmatpush1.msra.mxu0 0.0
        %1704 = vmatprep.subr.mxu0 0.0
        %1705 = vmatpush1.msra.mxu0 0.0
        %1706 = vmatprep.subr.mxu0 0.0
        %1707 = vmatpush1.msra.mxu0 0.0
        %1708 = vmatprep.subr.mxu0 0.0
        %1709 = vmatpush1.msra.mxu0 0.0
        %1710 = vmatprep.mubr.f32.mxu0 0.0
        %1711 = vmatmul.mubr.f32.gmra.mrb[0].mxu0 %v1644
        %v1712 = vpop.f32.mrb[0].mxu0
        %v1713 = vadd.f32 0.0, %v1712
        %v1714 = vpop.f32.mrb[0].mxu0
        %1715 = vdwg.mxu0
        %v1716 = vadd.f32 %v1634, %v1713
        %s1717 = scalar_lea.vmem %s3, 136
        %v1718 = vld [vmem:[%s1717] sm:$0xff]
        %1719 = vrot.lane.b32.xlu0 %v1063, 106
        %v1720 = vpop.permute.xlu0 %1719
        %1721 = vrot.lane.b32.xlu0 %v1064, 106
        %v1722 = vpop.permute.xlu0 %1721
        %v1723 = vsel %vm986, %v1720, %v1722
        %v1726 = vsel %vm335, %v1718, 0
        %1728 = vmatprep.subr.mxu0 0.0
        %1729 = vmatpush1.msra.mxu0 %v1723
        %1730 = vmatprep.subr.mxu0 0.0
        %1731 = vmatpush1.msra.mxu0 0.0
        %1732 = vmatprep.subr.mxu0 0.0
        %1733 = vmatpush1.msra.mxu0 0.0
        %1734 = vmatprep.subr.mxu0 0.0
        %1735 = vmatpush1.msra.mxu0 0.0
        %1736 = vmatprep.subr.mxu0 0.0
        %1737 = vmatpush1.msra.mxu0 0.0
        %1738 = vmatprep.subr.mxu0 0.0
        %1739 = vmatpush1.msra.mxu0 0.0
        %1740 = vmatprep.subr.mxu0 0.0
        %1741 = vmatpush1.msra.mxu0 0.0
        %1742 = vmatprep.subr.mxu0 0.0
        %1743 = vmatpush1.msra.mxu0 0.0
        %1744 = vmatprep.subr.mxu0 0.0
        %1745 = vmatpush1.msra.mxu0 0.0
        %1746 = vmatprep.subr.mxu0 0.0
        %1747 = vmatpush1.msra.mxu0 0.0
        %1748 = vmatprep.subr.mxu0 0.0
        %1749 = vmatpush1.msra.mxu0 0.0
        %1750 = vmatprep.subr.mxu0 0.0
        %1751 = vmatpush1.msra.mxu0 0.0
        %1752 = vmatprep.subr.mxu0 0.0
        %1753 = vmatpush1.msra.mxu0 0.0
        %1754 = vmatprep.subr.mxu0 0.0
        %1755 = vmatpush1.msra.mxu0 0.0
        %1756 = vmatprep.subr.mxu0 0.0
        %1757 = vmatpush1.msra.mxu0 0.0
        %1758 = vmatprep.subr.mxu0 0.0
        %1759 = vmatpush1.msra.mxu0 0.0
        %1760 = vmatprep.subr.mxu0 0.0
        %1761 = vmatpush1.msra.mxu0 0.0
        %1762 = vmatprep.subr.mxu0 0.0
        %1763 = vmatpush1.msra.mxu0 0.0
        %1764 = vmatprep.subr.mxu0 0.0
        %1765 = vmatpush1.msra.mxu0 0.0
        %1766 = vmatprep.subr.mxu0 0.0
        %1767 = vmatpush1.msra.mxu0 0.0
        %1768 = vmatprep.subr.mxu0 0.0
        %1769 = vmatpush1.msra.mxu0 0.0
        %1770 = vmatprep.subr.mxu0 0.0
        %1771 = vmatpush1.msra.mxu0 0.0
        %1772 = vmatprep.subr.mxu0 0.0
        %1773 = vmatpush1.msra.mxu0 0.0
        %1774 = vmatprep.subr.mxu0 0.0
        %1775 = vmatpush1.msra.mxu0 0.0
        %1776 = vmatprep.subr.mxu0 0.0
        %1777 = vmatpush1.msra.mxu0 0.0
        %1778 = vmatprep.subr.mxu0 0.0
        %1779 = vmatpush1.msra.mxu0 0.0
        %1780 = vmatprep.subr.mxu0 0.0
        %1781 = vmatpush1.msra.mxu0 0.0
        %1782 = vmatprep.subr.mxu0 0.0
        %1783 = vmatpush1.msra.mxu0 0.0
        %1784 = vmatprep.subr.mxu0 0.0
        %1785 = vmatpush1.msra.mxu0 0.0
        %1786 = vmatprep.subr.mxu0 0.0
        %1787 = vmatpush1.msra.mxu0 0.0
        %1788 = vmatprep.subr.mxu0 0.0
        %1789 = vmatpush1.msra.mxu0 0.0
        %1790 = vmatprep.subr.mxu0 0.0
        %1791 = vmatpush1.msra.mxu0 0.0
        %1792 = vmatprep.mubr.f32.mxu0 0.0
        %1793 = vmatmul.mubr.f32.gmra.mrb[0].mxu0 %v1726
        %v1794 = vpop.f32.mrb[0].mxu0
        %v1795 = vadd.f32 0.0, %v1794
        %v1796 = vpop.f32.mrb[0].mxu0
        %1797 = vdwg.mxu0
        %v1798 = vadd.f32 %v1716, %v1795
        %v1799 = vld [vmem:[%s284] sm:$0xff]
        %v1800 = vld [vmem:[%s284 + $0x8] sm:$0xff]
        %s1801 = scalar_lea.vmem %s3, 144
        %v1802 = vld [vmem:[%s1801] sm:$0xff]
        %v1804 = vsel %vm335, %v1802, 0
        %1806 = vmatprep.subr.mxu0 0.0
        %1807 = vmatpush1.msra.mxu0 %v1799
        %1808 = vmatprep.subr.mxu0 0.0
        %1809 = vmatpush1.msra.mxu0 0.0
        %1810 = vmatprep.subr.mxu0 0.0
        %1811 = vmatpush1.msra.mxu0 0.0
        %1812 = vmatprep.subr.mxu0 0.0
        %1813 = vmatpush1.msra.mxu0 0.0
        %1814 = vmatprep.subr.mxu0 0.0
        %1815 = vmatpush1.msra.mxu0 0.0
        %1816 = vmatprep.subr.mxu0 0.0
        %1817 = vmatpush1.msra.mxu0 0.0
        %1818 = vmatprep.subr.mxu0 0.0
        %1819 = vmatpush1.msra.mxu0 0.0
        %1820 = vmatprep.subr.mxu0 0.0
        %1821 = vmatpush1.msra.mxu0 0.0
        %1822 = vmatprep.subr.mxu0 0.0
        %1823 = vmatpush1.msra.mxu0 0.0
        %1824 = vmatprep.subr.mxu0 0.0
        %1825 = vmatpush1.msra.mxu0 0.0
        %1826 = vmatprep.subr.mxu0 0.0
        %1827 = vmatpush1.msra.mxu0 0.0
        %1828 = vmatprep.subr.mxu0 0.0
        %1829 = vmatpush1.msra.mxu0 0.0
        %1830 = vmatprep.subr.mxu0 0.0
        %1831 = vmatpush1.msra.mxu0 0.0
        %1832 = vmatprep.subr.mxu0 0.0
        %1833 = vmatpush1.msra.mxu0 0.0
        %1834 = vmatprep.subr.mxu0 0.0
        %1835 = vmatpush1.msra.mxu0 0.0
        %1836 = vmatprep.subr.mxu0 0.0
        %1837 = vmatpush1.msra.mxu0 0.0
        %1838 = vmatprep.subr.mxu0 0.0
        %1839 = vmatpush1.msra.mxu0 0.0
        %1840 = vmatprep.subr.mxu0 0.0
        %1841 = vmatpush1.msra.mxu0 0.0
        %1842 = vmatprep.subr.mxu0 0.0
        %1843 = vmatpush1.msra.mxu0 0.0
        %1844 = vmatprep.subr.mxu0 0.0
        %1845 = vmatpush1.msra.mxu0 0.0
        %1846 = vmatprep.subr.mxu0 0.0
        %1847 = vmatpush1.msra.mxu0 0.0
        %1848 = vmatprep.subr.mxu0 0.0
        %1849 = vmatpush1.msra.mxu0 0.0
        %1850 = vmatprep.subr.mxu0 0.0
        %1851 = vmatpush1.msra.mxu0 0.0
        %1852 = vmatprep.subr.mxu0 0.0
        %1853 = vmatpush1.msra.mxu0 0.0
        %1854 = vmatprep.subr.mxu0 0.0
        %1855 = vmatpush1.msra.mxu0 0.0
        %1856 = vmatprep.subr.mxu0 0.0
        %1857 = vmatpush1.msra.mxu0 0.0
        %1858 = vmatprep.subr.mxu0 0.0
        %1859 = vmatpush1.msra.mxu0 0.0
        %1860 = vmatprep.subr.mxu0 0.0
        %1861 = vmatpush1.msra.mxu0 0.0
        %1862 = vmatprep.subr.mxu0 0.0
        %1863 = vmatpush1.msra.mxu0 0.0
        %1864 = vmatprep.subr.mxu0 0.0
        %1865 = vmatpush1.msra.mxu0 0.0
        %1866 = vmatprep.subr.mxu0 0.0
        %1867 = vmatpush1.msra.mxu0 0.0
        %1868 = vmatprep.subr.mxu0 0.0
        %1869 = vmatpush1.msra.mxu0 0.0
        %1870 = vmatprep.mubr.f32.mxu0 0.0
        %1871 = vmatmul.mubr.f32.gmra.mrb[0].mxu0 %v1804
        %v1872 = vpop.f32.mrb[0].mxu0
        %v1873 = vadd.f32 0.0, %v1872
        %v1874 = vpop.f32.mrb[0].mxu0
        %1875 = vdwg.mxu0
        %v1876 = vadd.f32 %v1798, %v1873
        %s1877 = scalar_lea.vmem %s3, 152
        %v1878 = vld [vmem:[%s1877] sm:$0xff]
        %1881 = vrot.lane.b32.xlu0 %v1799, 127
        %v1882 = vpop.permute.xlu0 %1881
        %1883 = vrot.lane.b32.xlu0 %v1800, 127
        %v1884 = vpop.permute.xlu0 %1883
        %v1885 = vsel %vm332, %v1882, %v1884
        %v1888 = vsel %vm335, %v1878, 0
        %1890 = vmatprep.subr.mxu0 0.0
        %1891 = vmatpush1.msra.mxu0 %v1885
        %1892 = vmatprep.subr.mxu0 0.0
        %1893 = vmatpush1.msra.mxu0 0.0
        %1894 = vmatprep.subr.mxu0 0.0
        %1895 = vmatpush1.msra.mxu0 0.0
        %1896 = vmatprep.subr.mxu0 0.0
        %1897 = vmatpush1.msra.mxu0 0.0
        %1898 = vmatprep.subr.mxu0 0.0
        %1899 = vmatpush1.msra.mxu0 0.0
        %1900 = vmatprep.subr.mxu0 0.0
        %1901 = vmatpush1.msra.mxu0 0.0
        %1902 = vmatprep.subr.mxu0 0.0
        %1903 = vmatpush1.msra.mxu0 0.0
        %1904 = vmatprep.subr.mxu0 0.0
        %1905 = vmatpush1.msra.mxu0 0.0
        %1906 = vmatprep.subr.mxu0 0.0
        %1907 = vmatpush1.msra.mxu0 0.0
        %1908 = vmatprep.subr.mxu0 0.0
        %1909 = vmatpush1.msra.mxu0 0.0
        %1910 = vmatprep.subr.mxu0 0.0
        %1911 = vmatpush1.msra.mxu0 0.0
        %1912 = vmatprep.subr.mxu0 0.0
        %1913 = vmatpush1.msra.mxu0 0.0
        %1914 = vmatprep.subr.mxu0 0.0
        %1915 = vmatpush1.msra.mxu0 0.0
        %1916 = vmatprep.subr.mxu0 0.0
        %1917 = vmatpush1.msra.mxu0 0.0
        %1918 = vmatprep.subr.mxu0 0.0
        %1919 = vmatpush1.msra.mxu0 0.0
        %1920 = vmatprep.subr.mxu0 0.0
        %1921 = vmatpush1.msra.mxu0 0.0
        %1922 = vmatprep.subr.mxu0 0.0
        %1923 = vmatpush1.msra.mxu0 0.0
        %1924 = vmatprep.subr.mxu0 0.0
        %1925 = vmatpush1.msra.mxu0 0.0
        %1926 = vmatprep.subr.mxu0 0.0
        %1927 = vmatpush1.msra.mxu0 0.0
        %1928 = vmatprep.subr.mxu0 0.0
        %1929 = vmatpush1.msra.mxu0 0.0
        %1930 = vmatprep.subr.mxu0 0.0
        %1931 = vmatpush1.msra.mxu0 0.0
        %1932 = vmatprep.subr.mxu0 0.0
        %1933 = vmatpush1.msra.mxu0 0.0
        %1934 = vmatprep.subr.mxu0 0.0
        %1935 = vmatpush1.msra.mxu0 0.0
        %1936 = vmatprep.subr.mxu0 0.0
        %1937 = vmatpush1.msra.mxu0 0.0
        %1938 = vmatprep.subr.mxu0 0.0
        %1939 = vmatpush1.msra.mxu0 0.0
        %1940 = vmatprep.subr.mxu0 0.0
        %1941 = vmatpush1.msra.mxu0 0.0
        %1942 = vmatprep.subr.mxu0 0.0
        %1943 = vmatpush1.msra.mxu0 0.0
        %1944 = vmatprep.subr.mxu0 0.0
        %1945 = vmatpush1.msra.mxu0 0.0
        %1946 = vmatprep.subr.mxu0 0.0
        %1947 = vmatpush1.msra.mxu0 0.0
        %1948 = vmatprep.subr.mxu0 0.0
        %1949 = vmatpush1.msra.mxu0 0.0
        %1950 = vmatprep.subr.mxu0 0.0
        %1951 = vmatpush1.msra.mxu0 0.0
        %1952 = vmatprep.subr.mxu0 0.0
        %1953 = vmatpush1.msra.mxu0 0.0
        %1954 = vmatprep.mubr.f32.mxu0 0.0
        %1955 = vmatmul.mubr.f32.gmra.mrb[0].mxu0 %v1888
        %v1956 = vpop.f32.mrb[0].mxu0
        %v1957 = vadd.f32 0.0, %v1956
        %v1958 = vpop.f32.mrb[0].mxu0
        %1959 = vdwg.mxu0
        %v1960 = vadd.f32 %v1876, %v1957
        %s1961 = scalar_lea.vmem %s3, 160
        %v1962 = vld [vmem:[%s1961] sm:$0xff]
        %1963 = vrot.lane.b32.xlu0 %v1799, 126
        %v1964 = vpop.permute.xlu0 %1963
        %1965 = vrot.lane.b32.xlu0 %v1800, 126
        %v1966 = vpop.permute.xlu0 %1965
        %v1967 = vsel %vm488, %v1964, %v1966
        %v1970 = vsel %vm335, %v1962, 0
        %1972 = vmatprep.subr.mxu0 0.0
        %1973 = vmatpush1.msra.mxu0 %v1967
        %1974 = vmatprep.subr.mxu0 0.0
        %1975 = vmatpush1.msra.mxu0 0.0
        %1976 = vmatprep.subr.mxu0 0.0
        %1977 = vmatpush1.msra.mxu0 0.0
        %1978 = vmatprep.subr.mxu0 0.0
        %1979 = vmatpush1.msra.mxu0 0.0
        %1980 = vmatprep.subr.mxu0 0.0
        %1981 = vmatpush1.msra.mxu0 0.0
        %1982 = vmatprep.subr.mxu0 0.0
        %1983 = vmatpush1.msra.mxu0 0.0
        %1984 = vmatprep.subr.mxu0 0.0
        %1985 = vmatpush1.msra.mxu0 0.0
        %1986 = vmatprep.subr.mxu0 0.0
        %1987 = vmatpush1.msra.mxu0 0.0
        %1988 = vmatprep.subr.mxu0 0.0
        %1989 = vmatpush1.msra.mxu0 0.0
        %1990 = vmatprep.subr.mxu0 0.0
        %1991 = vmatpush1.msra.mxu0 0.0
        %1992 = vmatprep.subr.mxu0 0.0
        %1993 = vmatpush1.msra.mxu0 0.0
        %1994 = vmatprep.subr.mxu0 0.0
        %1995 = vmatpush1.msra.mxu0 0.0
        %1996 = vmatprep.subr.mxu0 0.0
        %1997 = vmatpush1.msra.mxu0 0.0
        %1998 = vmatprep.subr.mxu0 0.0
        %1999 = vmatpush1.msra.mxu0 0.0
        %2000 = vmatprep.subr.mxu0 0.0
        %2001 = vmatpush1.msra.mxu0 0.0
        %2002 = vmatprep.subr.mxu0 0.0
        %2003 = vmatpush1.msra.mxu0 0.0
        %2004 = vmatprep.subr.mxu0 0.0
        %2005 = vmatpush1.msra.mxu0 0.0
        %2006 = vmatprep.subr.mxu0 0.0
        %2007 = vmatpush1.msra.mxu0 0.0
        %2008 = vmatprep.subr.mxu0 0.0
        %2009 = vmatpush1.msra.mxu0 0.0
        %2010 = vmatprep.subr.mxu0 0.0
        %2011 = vmatpush1.msra.mxu0 0.0
        %2012 = vmatprep.subr.mxu0 0.0
        %2013 = vmatpush1.msra.mxu0 0.0
        %2014 = vmatprep.subr.mxu0 0.0
        %2015 = vmatpush1.msra.mxu0 0.0
        %2016 = vmatprep.subr.mxu0 0.0
        %2017 = vmatpush1.msra.mxu0 0.0
        %2018 = vmatprep.subr.mxu0 0.0
        %2019 = vmatpush1.msra.mxu0 0.0
        %2020 = vmatprep.subr.mxu0 0.0
        %2021 = vmatpush1.msra.mxu0 0.0
        %2022 = vmatprep.subr.mxu0 0.0
        %2023 = vmatpush1.msra.mxu0 0.0
        %2024 = vmatprep.subr.mxu0 0.0
        %2025 = vmatpush1.msra.mxu0 0.0
        %2026 = vmatprep.subr.mxu0 0.0
        %2027 = vmatpush1.msra.mxu0 0.0
        %2028 = vmatprep.subr.mxu0 0.0
        %2029 = vmatpush1.msra.mxu0 0.0
        %2030 = vmatprep.subr.mxu0 0.0
        %2031 = vmatpush1.msra.mxu0 0.0
        %2032 = vmatprep.subr.mxu0 0.0
        %2033 = vmatpush1.msra.mxu0 0.0
        %2034 = vmatprep.subr.mxu0 0.0
        %2035 = vmatpush1.msra.mxu0 0.0
        %2036 = vmatprep.mubr.f32.mxu0 0.0
        %2037 = vmatmul.mubr.f32.gmra.mrb[0].mxu0 %v1970
        %v2038 = vpop.f32.mrb[0].mxu0
        %v2039 = vadd.f32 0.0, %v2038
        %v2040 = vpop.f32.mrb[0].mxu0
        %2041 = vdwg.mxu0
        %v2042 = vadd.f32 %v1960, %v2039
        %s2043 = scalar_lea.vmem %s3, 168
        %v2044 = vld [vmem:[%s2043] sm:$0xff]
        %2045 = vrot.lane.b32.xlu0 %v1799, 118
        %v2046 = vpop.permute.xlu0 %2045
        %2047 = vrot.lane.b32.xlu0 %v1800, 118
        %v2048 = vpop.permute.xlu0 %2047
        %v2049 = vsel %vm571, %v2046, %v2048
        %v2052 = vsel %vm335, %v2044, 0
        %2054 = vmatprep.subr.mxu0 0.0
        %2055 = vmatpush1.msra.mxu0 %v2049
        %2056 = vmatprep.subr.mxu0 0.0
        %2057 = vmatpush1.msra.mxu0 0.0
        %2058 = vmatprep.subr.mxu0 0.0
        %2059 = vmatpush1.msra.mxu0 0.0
        %2060 = vmatprep.subr.mxu0 0.0
        %2061 = vmatpush1.msra.mxu0 0.0
        %2062 = vmatprep.subr.mxu0 0.0
        %2063 = vmatpush1.msra.mxu0 0.0
        %2064 = vmatprep.subr.mxu0 0.0
        %2065 = vmatpush1.msra.mxu0 0.0
        %2066 = vmatprep.subr.mxu0 0.0
        %2067 = vmatpush1.msra.mxu0 0.0
        %2068 = vmatprep.subr.mxu0 0.0
        %2069 = vmatpush1.msra.mxu0 0.0
        %2070 = vmatprep.subr.mxu0 0.0
        %2071 = vmatpush1.msra.mxu0 0.0
        %2072 = vmatprep.subr.mxu0 0.0
        %2073 = vmatpush1.msra.mxu0 0.0
        %2074 = vmatprep.subr.mxu0 0.0
        %2075 = vmatpush1.msra.mxu0 0.0
        %2076 = vmatprep.subr.mxu0 0.0
        %2077 = vmatpush1.msra.mxu0 0.0
        %2078 = vmatprep.subr.mxu0 0.0
        %2079 = vmatpush1.msra.mxu0 0.0
        %2080 = vmatprep.subr.mxu0 0.0
        %2081 = vmatpush1.msra.mxu0 0.0
        %2082 = vmatprep.subr.mxu0 0.0
        %2083 = vmatpush1.msra.mxu0 0.0
        %2084 = vmatprep.subr.mxu0 0.0
        %2085 = vmatpush1.msra.mxu0 0.0
        %2086 = vmatprep.subr.mxu0 0.0
        %2087 = vmatpush1.msra.mxu0 0.0
        %2088 = vmatprep.subr.mxu0 0.0
        %2089 = vmatpush1.msra.mxu0 0.0
        %2090 = vmatprep.subr.mxu0 0.0
        %2091 = vmatpush1.msra.mxu0 0.0
        %2092 = vmatprep.subr.mxu0 0.0
        %2093 = vmatpush1.msra.mxu0 0.0
        %2094 = vmatprep.subr.mxu0 0.0
        %2095 = vmatpush1.msra.mxu0 0.0
        %2096 = vmatprep.subr.mxu0 0.0
        %2097 = vmatpush1.msra.mxu0 0.0
        %2098 = vmatprep.subr.mxu0 0.0
        %2099 = vmatpush1.msra.mxu0 0.0
        %2100 = vmatprep.subr.mxu0 0.0
        %2101 = vmatpush1.msra.mxu0 0.0
        %2102 = vmatprep.subr.mxu0 0.0
        %2103 = vmatpush1.msra.mxu0 0.0
        %2104 = vmatprep.subr.mxu0 0.0
        %2105 = vmatpush1.msra.mxu0 0.0
        %2106 = vmatprep.subr.mxu0 0.0
        %2107 = vmatpush1.msra.mxu0 0.0
        %2108 = vmatprep.subr.mxu0 0.0
        %2109 = vmatpush1.msra.mxu0 0.0
        %2110 = vmatprep.subr.mxu0 0.0
        %2111 = vmatpush1.msra.mxu0 0.0
        %2112 = vmatprep.subr.mxu0 0.0
        %2113 = vmatpush1.msra.mxu0 0.0
        %2114 = vmatprep.subr.mxu0 0.0
        %2115 = vmatpush1.msra.mxu0 0.0
        %2116 = vmatprep.subr.mxu0 0.0
        %2117 = vmatpush1.msra.mxu0 0.0
        %2118 = vmatprep.mubr.f32.mxu0 0.0
        %2119 = vmatmul.mubr.f32.gmra.mrb[0].mxu0 %v2052
        %v2120 = vpop.f32.mrb[0].mxu0
        %v2121 = vadd.f32 0.0, %v2120
        %v2122 = vpop.f32.mrb[0].mxu0
        %2123 = vdwg.mxu0
        %v2124 = vadd.f32 %v2042, %v2121
        %s2125 = scalar_lea.vmem %s3, 176
        %v2126 = vld [vmem:[%s2125] sm:$0xff]
        %2127 = vrot.lane.b32.xlu0 %v1799, 117
        %v2128 = vpop.permute.xlu0 %2127
        %2129 = vrot.lane.b32.xlu0 %v1800, 117
        %v2130 = vpop.permute.xlu0 %2129
        %v2131 = vsel %vm654, %v2128, %v2130
        %v2134 = vsel %vm335, %v2126, 0
        %2136 = vmatprep.subr.mxu0 0.0
        %2137 = vmatpush1.msra.mxu0 %v2131
        %2138 = vmatprep.subr.mxu0 0.0
        %2139 = vmatpush1.msra.mxu0 0.0
        %2140 = vmatprep.subr.mxu0 0.0
        %2141 = vmatpush1.msra.mxu0 0.0
        %2142 = vmatprep.subr.mxu0 0.0
        %2143 = vmatpush1.msra.mxu0 0.0
        %2144 = vmatprep.subr.mxu0 0.0
        %2145 = vmatpush1.msra.mxu0 0.0
        %2146 = vmatprep.subr.mxu0 0.0
        %2147 = vmatpush1.msra.mxu0 0.0
        %2148 = vmatprep.subr.mxu0 0.0
        %2149 = vmatpush1.msra.mxu0 0.0
        %2150 = vmatprep.subr.mxu0 0.0
        %2151 = vmatpush1.msra.mxu0 0.0
        %2152 = vmatprep.subr.mxu0 0.0
        %2153 = vmatpush1.msra.mxu0 0.0
        %2154 = vmatprep.subr.mxu0 0.0
        %2155 = vmatpush1.msra.mxu0 0.0
        %2156 = vmatprep.subr.mxu0 0.0
        %2157 = vmatpush1.msra.mxu0 0.0
        %2158 = vmatprep.subr.mxu0 0.0
        %2159 = vmatpush1.msra.mxu0 0.0
        %2160 = vmatprep.subr.mxu0 0.0
        %2161 = vmatpush1.msra.mxu0 0.0
        %2162 = vmatprep.subr.mxu0 0.0
        %2163 = vmatpush1.msra.mxu0 0.0
        %2164 = vmatprep.subr.mxu0 0.0
        %2165 = vmatpush1.msra.mxu0 0.0
        %2166 = vmatprep.subr.mxu0 0.0
        %2167 = vmatpush1.msra.mxu0 0.0
        %2168 = vmatprep.subr.mxu0 0.0
        %2169 = vmatpush1.msra.mxu0 0.0
        %2170 = vmatprep.subr.mxu0 0.0
        %2171 = vmatpush1.msra.mxu0 0.0
        %2172 = vmatprep.subr.mxu0 0.0
        %2173 = vmatpush1.msra.mxu0 0.0
        %2174 = vmatprep.subr.mxu0 0.0
        %2175 = vmatpush1.msra.mxu0 0.0
        %2176 = vmatprep.subr.mxu0 0.0
        %2177 = vmatpush1.msra.mxu0 0.0
        %2178 = vmatprep.subr.mxu0 0.0
        %2179 = vmatpush1.msra.mxu0 0.0
        %2180 = vmatprep.subr.mxu0 0.0
        %2181 = vmatpush1.msra.mxu0 0.0
        %2182 = vmatprep.subr.mxu0 0.0
        %2183 = vmatpush1.msra.mxu0 0.0
        %2184 = vmatprep.subr.mxu0 0.0
        %2185 = vmatpush1.msra.mxu0 0.0
        %2186 = vmatprep.subr.mxu0 0.0
        %2187 = vmatpush1.msra.mxu0 0.0
        %2188 = vmatprep.subr.mxu0 0.0
        %2189 = vmatpush1.msra.mxu0 0.0
        %2190 = vmatprep.subr.mxu0 0.0
        %2191 = vmatpush1.msra.mxu0 0.0
        %2192 = vmatprep.subr.mxu0 0.0
        %2193 = vmatpush1.msra.mxu0 0.0
        %2194 = vmatprep.subr.mxu0 0.0
        %2195 = vmatpush1.msra.mxu0 0.0
        %2196 = vmatprep.subr.mxu0 0.0
        %2197 = vmatpush1.msra.mxu0 0.0
        %2198 = vmatprep.subr.mxu0 0.0
        %2199 = vmatpush1.msra.mxu0 0.0
        %2200 = vmatprep.mubr.f32.mxu0 0.0
        %2201 = vmatmul.mubr.f32.gmra.mrb[0].mxu0 %v2134
        %v2202 = vpop.f32.mrb[0].mxu0
        %v2203 = vadd.f32 0.0, %v2202
        %v2204 = vpop.f32.mrb[0].mxu0
        %2205 = vdwg.mxu0
        %v2206 = vadd.f32 %v2124, %v2203
        %s2207 = scalar_lea.vmem %s3, 184
        %v2208 = vld [vmem:[%s2207] sm:$0xff]
        %2209 = vrot.lane.b32.xlu0 %v1799, 116
        %v2210 = vpop.permute.xlu0 %2209
        %2211 = vrot.lane.b32.xlu0 %v1800, 116
        %v2212 = vpop.permute.xlu0 %2211
        %v2213 = vsel %vm737, %v2210, %v2212
        %v2216 = vsel %vm335, %v2208, 0
        %2218 = vmatprep.subr.mxu0 0.0
        %2219 = vmatpush1.msra.mxu0 %v2213
        %2220 = vmatprep.subr.mxu0 0.0
        %2221 = vmatpush1.msra.mxu0 0.0
        %2222 = vmatprep.subr.mxu0 0.0
        %2223 = vmatpush1.msra.mxu0 0.0
        %2224 = vmatprep.subr.mxu0 0.0
        %2225 = vmatpush1.msra.mxu0 0.0
        %2226 = vmatprep.subr.mxu0 0.0
        %2227 = vmatpush1.msra.mxu0 0.0
        %2228 = vmatprep.subr.mxu0 0.0
        %2229 = vmatpush1.msra.mxu0 0.0
        %2230 = vmatprep.subr.mxu0 0.0
        %2231 = vmatpush1.msra.mxu0 0.0
        %2232 = vmatprep.subr.mxu0 0.0
        %2233 = vmatpush1.msra.mxu0 0.0
        %2234 = vmatprep.subr.mxu0 0.0
        %2235 = vmatpush1.msra.mxu0 0.0
        %2236 = vmatprep.subr.mxu0 0.0
        %2237 = vmatpush1.msra.mxu0 0.0
        %2238 = vmatprep.subr.mxu0 0.0
        %2239 = vmatpush1.msra.mxu0 0.0
        %2240 = vmatprep.subr.mxu0 0.0
        %2241 = vmatpush1.msra.mxu0 0.0
        %2242 = vmatprep.subr.mxu0 0.0
        %2243 = vmatpush1.msra.mxu0 0.0
        %2244 = vmatprep.subr.mxu0 0.0
        %2245 = vmatpush1.msra.mxu0 0.0
        %2246 = vmatprep.subr.mxu0 0.0
        %2247 = vmatpush1.msra.mxu0 0.0
        %2248 = vmatprep.subr.mxu0 0.0
        %2249 = vmatpush1.msra.mxu0 0.0
        %2250 = vmatprep.subr.mxu0 0.0
        %2251 = vmatpush1.msra.mxu0 0.0
        %2252 = vmatprep.subr.mxu0 0.0
        %2253 = vmatpush1.msra.mxu0 0.0
        %2254 = vmatprep.subr.mxu0 0.0
        %2255 = vmatpush1.msra.mxu0 0.0
        %2256 = vmatprep.subr.mxu0 0.0
        %2257 = vmatpush1.msra.mxu0 0.0
        %2258 = vmatprep.subr.mxu0 0.0
        %2259 = vmatpush1.msra.mxu0 0.0
        %2260 = vmatprep.subr.mxu0 0.0
        %2261 = vmatpush1.msra.mxu0 0.0
        %2262 = vmatprep.subr.mxu0 0.0
        %2263 = vmatpush1.msra.mxu0 0.0
        %2264 = vmatprep.subr.mxu0 0.0
        %2265 = vmatpush1.msra.mxu0 0.0
        %2266 = vmatprep.subr.mxu0 0.0
        %2267 = vmatpush1.msra.mxu0 0.0
        %2268 = vmatprep.subr.mxu0 0.0
        %2269 = vmatpush1.msra.mxu0 0.0
        %2270 = vmatprep.subr.mxu0 0.0
        %2271 = vmatpush1.msra.mxu0 0.0
        %2272 = vmatprep.subr.mxu0 0.0
        %2273 = vmatpush1.msra.mxu0 0.0
        %2274 = vmatprep.subr.mxu0 0.0
        %2275 = vmatpush1.msra.mxu0 0.0
        %2276 = vmatprep.subr.mxu0 0.0
        %2277 = vmatpush1.msra.mxu0 0.0
        %2278 = vmatprep.subr.mxu0 0.0
        %2279 = vmatpush1.msra.mxu0 0.0
        %2280 = vmatprep.subr.mxu0 0.0
        %2281 = vmatpush1.msra.mxu0 0.0
        %2282 = vmatprep.mubr.f32.mxu0 0.0
        %2283 = vmatmul.mubr.f32.gmra.mrb[0].mxu0 %v2216
        %v2284 = vpop.f32.mrb[0].mxu0
        %v2285 = vadd.f32 0.0, %v2284
        %v2286 = vpop.f32.mrb[0].mxu0
        %2287 = vdwg.mxu0
        %v2288 = vadd.f32 %v2206, %v2285
        %s2289 = scalar_lea.vmem %s3, 192
        %v2290 = vld [vmem:[%s2289] sm:$0xff]
        %2291 = vrot.lane.b32.xlu0 %v1799, 108
        %v2292 = vpop.permute.xlu0 %2291
        %2293 = vrot.lane.b32.xlu0 %v1800, 108
        %v2294 = vpop.permute.xlu0 %2293
        %v2295 = vsel %vm820, %v2292, %v2294
        %v2298 = vsel %vm335, %v2290, 0
        %2300 = vmatprep.subr.mxu0 0.0
        %2301 = vmatpush1.msra.mxu0 %v2295
        %2302 = vmatprep.subr.mxu0 0.0
        %2303 = vmatpush1.msra.mxu0 0.0
        %2304 = vmatprep.subr.mxu0 0.0
        %2305 = vmatpush1.msra.mxu0 0.0
        %2306 = vmatprep.subr.mxu0 0.0
        %2307 = vmatpush1.msra.mxu0 0.0
        %2308 = vmatprep.subr.mxu0 0.0
        %2309 = vmatpush1.msra.mxu0 0.0
        %2310 = vmatprep.subr.mxu0 0.0
        %2311 = vmatpush1.msra.mxu0 0.0
        %2312 = vmatprep.subr.mxu0 0.0
        %2313 = vmatpush1.msra.mxu0 0.0
        %2314 = vmatprep.subr.mxu0 0.0
        %2315 = vmatpush1.msra.mxu0 0.0
        %2316 = vmatprep.subr.mxu0 0.0
        %2317 = vmatpush1.msra.mxu0 0.0
        %2318 = vmatprep.subr.mxu0 0.0
        %2319 = vmatpush1.msra.mxu0 0.0
        %2320 = vmatprep.subr.mxu0 0.0
        %2321 = vmatpush1.msra.mxu0 0.0
        %2322 = vmatprep.subr.mxu0 0.0
        %2323 = vmatpush1.msra.mxu0 0.0
        %2324 = vmatprep.subr.mxu0 0.0
        %2325 = vmatpush1.msra.mxu0 0.0
        %2326 = vmatprep.subr.mxu0 0.0
        %2327 = vmatpush1.msra.mxu0 0.0
        %2328 = vmatprep.subr.mxu0 0.0
        %2329 = vmatpush1.msra.mxu0 0.0
        %2330 = vmatprep.subr.mxu0 0.0
        %2331 = vmatpush1.msra.mxu0 0.0
        %2332 = vmatprep.subr.mxu0 0.0
        %2333 = vmatpush1.msra.mxu0 0.0
        %2334 = vmatprep.subr.mxu0 0.0
        %2335 = vmatpush1.msra.mxu0 0.0
        %2336 = vmatprep.subr.mxu0 0.0
        %2337 = vmatpush1.msra.mxu0 0.0
        %2338 = vmatprep.subr.mxu0 0.0
        %2339 = vmatpush1.msra.mxu0 0.0
        %2340 = vmatprep.subr.mxu0 0.0
        %2341 = vmatpush1.msra.mxu0 0.0
        %2342 = vmatprep.subr.mxu0 0.0
        %2343 = vmatpush1.msra.mxu0 0.0
        %2344 = vmatprep.subr.mxu0 0.0
        %2345 = vmatpush1.msra.mxu0 0.0
        %2346 = vmatprep.subr.mxu0 0.0
        %2347 = vmatpush1.msra.mxu0 0.0
        %2348 = vmatprep.subr.mxu0 0.0
        %2349 = vmatpush1.msra.mxu0 0.0
        %2350 = vmatprep.subr.mxu0 0.0
        %2351 = vmatpush1.msra.mxu0 0.0
        %2352 = vmatprep.subr.mxu0 0.0
        %2353 = vmatpush1.msra.mxu0 0.0
        %2354 = vmatprep.subr.mxu0 0.0
        %2355 = vmatpush1.msra.mxu0 0.0
        %2356 = vmatprep.subr.mxu0 0.0
        %2357 = vmatpush1.msra.mxu0 0.0
        %2358 = vmatprep.subr.mxu0 0.0
        %2359 = vmatpush1.msra.mxu0 0.0
        %2360 = vmatprep.subr.mxu0 0.0
        %2361 = vmatpush1.msra.mxu0 0.0
        %2362 = vmatprep.subr.mxu0 0.0
        %2363 = vmatpush1.msra.mxu0 0.0
        %2364 = vmatprep.mubr.f32.mxu0 0.0
        %2365 = vmatmul.mubr.f32.gmra.mrb[0].mxu0 %v2298
        %v2366 = vpop.f32.mrb[0].mxu0
        %v2367 = vadd.f32 0.0, %v2366
        %v2368 = vpop.f32.mrb[0].mxu0
        %2369 = vdwg.mxu0
        %v2370 = vadd.f32 %v2288, %v2367
        %s2371 = scalar_lea.vmem %s3, 200
        %v2372 = vld [vmem:[%s2371] sm:$0xff]
        %2373 = vrot.lane.b32.xlu0 %v1799, 107
        %v2374 = vpop.permute.xlu0 %2373
        %2375 = vrot.lane.b32.xlu0 %v1800, 107
        %v2376 = vpop.permute.xlu0 %2375
        %v2377 = vsel %vm903, %v2374, %v2376
        %v2380 = vsel %vm335, %v2372, 0
        %2382 = vmatprep.subr.mxu0 0.0
        %2383 = vmatpush1.msra.mxu0 %v2377
        %2384 = vmatprep.subr.mxu0 0.0
        %2385 = vmatpush1.msra.mxu0 0.0
        %2386 = vmatprep.subr.mxu0 0.0
        %2387 = vmatpush1.msra.mxu0 0.0
        %2388 = vmatprep.subr.mxu0 0.0
        %2389 = vmatpush1.msra.mxu0 0.0
        %2390 = vmatprep.subr.mxu0 0.0
        %2391 = vmatpush1.msra.mxu0 0.0
        %2392 = vmatprep.subr.mxu0 0.0
        %2393 = vmatpush1.msra.mxu0 0.0
        %2394 = vmatprep.subr.mxu0 0.0
        %2395 = vmatpush1.msra.mxu0 0.0
        %2396 = vmatprep.subr.mxu0 0.0
        %2397 = vmatpush1.msra.mxu0 0.0
        %2398 = vmatprep.subr.mxu0 0.0
        %2399 = vmatpush1.msra.mxu0 0.0
        %2400 = vmatprep.subr.mxu0 0.0
        %2401 = vmatpush1.msra.mxu0 0.0
        %2402 = vmatprep.subr.mxu0 0.0
        %2403 = vmatpush1.msra.mxu0 0.0
        %2404 = vmatprep.subr.mxu0 0.0
        %2405 = vmatpush1.msra.mxu0 0.0
        %2406 = vmatprep.subr.mxu0 0.0
        %2407 = vmatpush1.msra.mxu0 0.0
        %2408 = vmatprep.subr.mxu0 0.0
        %2409 = vmatpush1.msra.mxu0 0.0
        %2410 = vmatprep.subr.mxu0 0.0
        %2411 = vmatpush1.msra.mxu0 0.0
        %2412 = vmatprep.subr.mxu0 0.0
        %2413 = vmatpush1.msra.mxu0 0.0
        %2414 = vmatprep.subr.mxu0 0.0
        %2415 = vmatpush1.msra.mxu0 0.0
        %2416 = vmatprep.subr.mxu0 0.0
        %2417 = vmatpush1.msra.mxu0 0.0
        %2418 = vmatprep.subr.mxu0 0.0
        %2419 = vmatpush1.msra.mxu0 0.0
        %2420 = vmatprep.subr.mxu0 0.0
        %2421 = vmatpush1.msra.mxu0 0.0
        %2422 = vmatprep.subr.mxu0 0.0
        %2423 = vmatpush1.msra.mxu0 0.0
        %2424 = vmatprep.subr.mxu0 0.0
        %2425 = vmatpush1.msra.mxu0 0.0
        %2426 = vmatprep.subr.mxu0 0.0
        %2427 = vmatpush1.msra.mxu0 0.0
        %2428 = vmatprep.subr.mxu0 0.0
        %2429 = vmatpush1.msra.mxu0 0.0
        %2430 = vmatprep.subr.mxu0 0.0
        %2431 = vmatpush1.msra.mxu0 0.0
        %2432 = vmatprep.subr.mxu0 0.0
        %2433 = vmatpush1.msra.mxu0 0.0
        %2434 = vmatprep.subr.mxu0 0.0
        %2435 = vmatpush1.msra.mxu0 0.0
        %2436 = vmatprep.subr.mxu0 0.0
        %2437 = vmatpush1.msra.mxu0 0.0
        %2438 = vmatprep.subr.mxu0 0.0
        %2439 = vmatpush1.msra.mxu0 0.0
        %2440 = vmatprep.subr.mxu0 0.0
        %2441 = vmatpush1.msra.mxu0 0.0
        %2442 = vmatprep.subr.mxu0 0.0
        %2443 = vmatpush1.msra.mxu0 0.0
        %2444 = vmatprep.subr.mxu0 0.0
        %2445 = vmatpush1.msra.mxu0 0.0
        %2446 = vmatprep.mubr.f32.mxu0 0.0
        %2447 = vmatmul.mubr.f32.gmra.mrb[0].mxu0 %v2380
        %v2448 = vpop.f32.mrb[0].mxu0
        %v2449 = vadd.f32 0.0, %v2448
        %v2450 = vpop.f32.mrb[0].mxu0
        %2451 = vdwg.mxu0
        %v2452 = vadd.f32 %v2370, %v2449
        %s2453 = scalar_lea.vmem %s3, 208
        %v2454 = vld [vmem:[%s2453] sm:$0xff]
        %2455 = vrot.lane.b32.xlu0 %v1799, 106
        %v2456 = vpop.permute.xlu0 %2455
        %2457 = vrot.lane.b32.xlu0 %v1800, 106
        %v2458 = vpop.permute.xlu0 %2457
        %v2459 = vsel %vm986, %v2456, %v2458
        %v2462 = vsel %vm335, %v2454, 0
        %2464 = vmatprep.subr.mxu0 0.0
        %2465 = vmatpush1.msra.mxu0 %v2459
        %2466 = vmatprep.subr.mxu0 0.0
        %2467 = vmatpush1.msra.mxu0 0.0
        %2468 = vmatprep.subr.mxu0 0.0
        %2469 = vmatpush1.msra.mxu0 0.0
        %2470 = vmatprep.subr.mxu0 0.0
        %2471 = vmatpush1.msra.mxu0 0.0
        %2472 = vmatprep.subr.mxu0 0.0
        %2473 = vmatpush1.msra.mxu0 0.0
        %2474 = vmatprep.subr.mxu0 0.0
        %2475 = vmatpush1.msra.mxu0 0.0
        %2476 = vmatprep.subr.mxu0 0.0
        %2477 = vmatpush1.msra.mxu0 0.0
        %2478 = vmatprep.subr.mxu0 0.0
        %2479 = vmatpush1.msra.mxu0 0.0
        %2480 = vmatprep.subr.mxu0 0.0
        %2481 = vmatpush1.msra.mxu0 0.0
        %2482 = vmatprep.subr.mxu0 0.0
        %2483 = vmatpush1.msra.mxu0 0.0
        %2484 = vmatprep.subr.mxu0 0.0
        %2485 = vmatpush1.msra.mxu0 0.0
        %2486 = vmatprep.subr.mxu0 0.0
        %2487 = vmatpush1.msra.mxu0 0.0
        %2488 = vmatprep.subr.mxu0 0.0
        %2489 = vmatpush1.msra.mxu0 0.0
        %2490 = vmatprep.subr.mxu0 0.0
        %2491 = vmatpush1.msra.mxu0 0.0
        %2492 = vmatprep.subr.mxu0 0.0
        %2493 = vmatpush1.msra.mxu0 0.0
        %2494 = vmatprep.subr.mxu0 0.0
        %2495 = vmatpush1.msra.mxu0 0.0
        %2496 = vmatprep.subr.mxu0 0.0
        %2497 = vmatpush1.msra.mxu0 0.0
        %2498 = vmatprep.subr.mxu0 0.0
        %2499 = vmatpush1.msra.mxu0 0.0
        %2500 = vmatprep.subr.mxu0 0.0
        %2501 = vmatpush1.msra.mxu0 0.0
        %2502 = vmatprep.subr.mxu0 0.0
        %2503 = vmatpush1.msra.mxu0 0.0
        %2504 = vmatprep.subr.mxu0 0.0
        %2505 = vmatpush1.msra.mxu0 0.0
        %2506 = vmatprep.subr.mxu0 0.0
        %2507 = vmatpush1.msra.mxu0 0.0
        %2508 = vmatprep.subr.mxu0 0.0
        %2509 = vmatpush1.msra.mxu0 0.0
        %2510 = vmatprep.subr.mxu0 0.0
        %2511 = vmatpush1.msra.mxu0 0.0
        %2512 = vmatprep.subr.mxu0 0.0
        %2513 = vmatpush1.msra.mxu0 0.0
        %2514 = vmatprep.subr.mxu0 0.0
        %2515 = vmatpush1.msra.mxu0 0.0
        %2516 = vmatprep.subr.mxu0 0.0
        %2517 = vmatpush1.msra.mxu0 0.0
        %2518 = vmatprep.subr.mxu0 0.0
        %2519 = vmatpush1.msra.mxu0 0.0
        %2520 = vmatprep.subr.mxu0 0.0
        %2521 = vmatpush1.msra.mxu0 0.0
        %2522 = vmatprep.subr.mxu0 0.0
        %2523 = vmatpush1.msra.mxu0 0.0
        %2524 = vmatprep.subr.mxu0 0.0
        %2525 = vmatpush1.msra.mxu0 0.0
        %2526 = vmatprep.subr.mxu0 0.0
        %2527 = vmatpush1.msra.mxu0 0.0
        %2528 = vmatprep.mubr.f32.mxu0 0.0
        %2529 = vmatmul.mubr.f32.gmra.mrb[0].mxu0 %v2462
        %v2530 = vpop.f32.mrb[0].mxu0
        %v2531 = vadd.f32 0.0, %v2530
        %v2532 = vpop.f32.mrb[0].mxu0
        %2533 = vdwg.mxu0
        %v2534 = vadd.f32 %v2452, %v2531
        %2535 = vst [vmem:[%s318] sm:$0xff] %v2534
        %s2536 = sand.u32 %s155, 1
        %s2537 = scalar_lea.sflag [#allocation4], %s2536
        %s2538 = sand.u32 %s155, 1
        %s2539 = smul.addr %s2538, 8
        %s2540 = scalar_lea.vmem [#allocation8], %s2539
        // Predicated region
        $region49: #{tpu_custom_call.1} parent=35 // pred_check
          %p2541 = pneg %p165
        $region50: #{tpu_custom_call.1} parent=35 // pred_check_branch
          %2543 = sbr.rel (%p2541) target = $region52
        $region51: #{tpu_custom_call.1} parent=35 // pred_region
          %s2545 = ssub.s32 128, 128
          %2546 = vsyncadd %s2537, %s2545
          %s2547 = smul.addr %s28, 8
          %s2548 = sadd.s32 %s29, %s2547
          %s2549 = smul.addr %s2548, 128
          %s2550 = scalar_lea.hbm %s4, %s2549
          %s2552 = sshll.u32 %s2540, 4
          %s2553 = int_to_ptr.vmem [resolvable:$true] %s2552
          %2555 = dma.vmem_to_hbm [thread:$0]  %s2553, 128, %s2550, %s2537
        $region52: #{tpu_custom_call.1} parent=35 // pred_fallthru
          _
      $region36: #{tpu_custom_call.1} parent=5 // pred_fallthru
        _
      %p2556 = scmp.le.s32.totalorder 2, %s19
      // Predicated region
      $region53: #{tpu_custom_call.1} parent=5 // pred_check
        %p2557 = pneg %p2556
      $region54: #{tpu_custom_call.1} parent=5 // pred_check_branch
        %2559 = sbr.rel (%p2557) target = $region56
      $region55: #{tpu_custom_call.1} parent=5 // pred_region
        %s2560 = ssub.s32 %s19, 2
        // Predicated region
        $region57: #{tpu_custom_call.1} parent=55 // pred_check
          %p2561 = pneg %p171
        $region58: #{tpu_custom_call.1} parent=55 // pred_check_branch
          %2563 = sbr.rel (%p2561) target = $region60
        $region59: #{tpu_custom_call.1} parent=55 // pred_region
          %s2564 = sand.u32 %s156, 1
          %s2565 = scalar_lea.sflag [#allocation4], %s2564
          %s2566 = sand.u32 %s156, 1
          %s2567 = smul.addr %s2566, 8
          %s2568 = scalar_lea.vmem [#allocation8], %s2567
          %2569 = dma.done %s2565, 128
        $region60: #{tpu_custom_call.1} parent=55 // pred_fallthru
          _
      $region56: #{tpu_custom_call.1} parent=5 // pred_fallthru
        _
    $region6: #{tpu_custom_call.1} parent=1 // loop_footer
      %s23 = sadd.s32 1, %s19
    $region7: #{tpu_custom_call.1} parent=1 // loop_footer_branch
      %18 = sbr.rel target = $region3
    $region8: #{tpu_custom_call.1} parent=1 // loop_exit
      _
    %2570 = vsyncpa [#allocation3], 1
    %s2571 = scalar_lea.sflag [#allocation3], 1
    %2572 = vsyncpa %s2571, 1
    %2573 = vsyncpa [#allocation6], 1
    %s2574 = scalar_lea.sflag [#allocation6], 1
    %2575 = vsyncpa %s2574, 1
    %2576 = vsyncpa [#allocation4], 1
    %s2577 = scalar_lea.sflag [#allocation4], 1
    %2578 = vsyncpa %s2577, 1

</llo_original>
